<compile_context>
chip_gen: v5e
topology: v5e:2x2
jax: 0.10.0
libtpu: 0.0.40
codegen_flags: <defaults>
</compile_context>

<pallas_src>
import jax
import jax.numpy as jnp
from jax import lax
from jax.experimental import pallas as pl
from jax.experimental.pallas import tpu as pltpu

# ----------------------------- configuration --------------------------------
BATCH       = 2
FEAT_C      = 32      # original: 512
INPUT_SIZE  = 8       # lstm_input_size (spatial H = W of f_I)
FC_OUT      = 128     # original: 4096
LSTM_HIDDEN = 32      # lstm_hidden_size
ZK_SIZE     = 16      # zk_size
NUM_CLASSES = 10      # original: 80 (COCO)
K_ITERS     = 3       # num_iterations (original default 5)

H = W = INPUT_SIZE
HP, WP = H // 2, W // 2
P = HP * WP           # pooled flattened spatial size
Q = H * W             # full-res flattened spatial size
D_FLAT = FEAT_C * P   # fc input size == C * (H/2) * (W/2)
HEADS  = NUM_CLASSES + 6          # get_score (10) | update_m (6) packed
TILE_F = min(FC_OUT, 512)         # fc-output streaming tile
assert FC_OUT % TILE_F == 0
N_FTILES = FC_OUT // TILE_F

f32 = jnp.float32


# ------------------------- Pallas kernel 1: ST + maxpool --------------------
def st_pool_kernel(ft_ref, g_ref, o_ref):
    """One lane-dense matmul per batch element: (4P,Q)@(Q,C) then phase max.
    ft_ref: (1, Q, C)   channel-last flattened feature map (loop-invariant)
    g_ref : (1, 4P, Q)  4 pooling-phase bilinear matrices stacked on rows
    o_ref : (1, P, C)   transformed + 2x2 max-pooled features (channel-last)
    """
    g = g_ref[0]                                             # (4P, Q)
    ft = ft_ref[0]                                           # (Q, C)
    v = jnp.dot(g, ft, preferred_element_type=f32)           # (4P, C) single MXU call
    # max over the 4 pooling phases: sublane-aligned static slices (P = 16)
    o_ref[0] = jnp.maximum(jnp.maximum(v[0 * P:1 * P], v[1 * P:2 * P]),
                           jnp.maximum(v[2 * P:3 * P], v[3 * P:4 * P]))


def st_pool(f_T, G):
    N = f_T.shape[0]
    return pl.pallas_call(
        st_pool_kernel,
        out_shape=jax.ShapeDtypeStruct((N, P, FEAT_C), f32),
        grid=(N,),
        in_specs=[pl.BlockSpec((1, Q, FEAT_C), lambda n: (n, 0, 0)),
                  pl.BlockSpec((1, 4 * P, Q), lambda n: (n, 0, 0))],
        out_specs=pl.BlockSpec((1, P, FEAT_C), lambda n: (n, 0, 0)),
        compiler_params=pltpu.CompilerParams(dimension_semantics=("parallel",)),
    )(f_T, G)


# -------------- Pallas kernel 2: fc (streamed) + LSTMCell + heads -----------
def _sigmoid(x):
    # exact sigmoid via tanh: stays on the EUP slot, no VPU divide chain.
    return 0.5 * (jnp.tanh(0.5 * x) + 1.0)


def fc_lstm_head_kernel(x_ref, h_ref, c_ref,
                        fcw_ref, fcb_ref,
                        wii_ref, wif_ref, wig_ref, wio_ref,
                        whi_ref, whf_ref, whg_ref, who_ref,
                        bi_ref, bf_ref, bg_ref, bo_ref,
                        zkw_ref, zkb_ref, hw_ref, hb_ref,
                        hc_out, head_out,
                        ai, af, ag, ao):
    """Grid axis = FC_OUT tiles ('arbitrary'): the fc weight streams through
    VMEM while the per-gate pre-activations accumulate in scratch; the LSTM
    gate math + heads run only on the last tile."""
    j = pl.program_id(0)

    @pl.when(j == 0)
    def _():
        ai[...] = jnp.zeros_like(ai)
        af[...] = jnp.zeros_like(af)
        ag[...] = jnp.zeros_like(ag)
        ao[...] = jnp.zeros_like(ao)

    # fc tile: (N, TILE_F)
    fc_tile = (jnp.dot(x_ref[...], fcw_ref[...], preferred_element_type=f32)
               + fcb_ref[...])
    # accumulate per-gate input contributions (never materialize full fc)
    ai[...] += jnp.dot(fc_tile, wii_ref[...], preferred_element_type=f32)
    af[...] += jnp.dot(fc_tile, wif_ref[...], preferred_element_type=f32)
    ag[...] += jnp.dot(fc_tile, wig_ref[...], preferred_element_type=f32)
    ao[...] += jnp.dot(fc_tile, wio_ref[...], preferred_element_type=f32)

    @pl.when(j == pl.num_programs(0) - 1)
    def _():
        h = h_ref[...]
        c = c_ref[...]
        g_i = _sigmoid(ai[...] + jnp.dot(h, whi_ref[...], preferred_element_type=f32) + bi_ref[...])
        g_f = _sigmoid(af[...] + jnp.dot(h, whf_ref[...], preferred_element_type=f32) + bf_ref[...])
        g_g = jnp.tanh(ag[...] + jnp.dot(h, whg_ref[...], preferred_element_type=f32) + bg_ref[...])
        g_o = _sigmoid(ao[...] + jnp.dot(h, who_ref[...], preferred_element_type=f32) + bo_ref[...])
        c_new = g_f * c + g_i * g_g
        h_new = g_o * jnp.tanh(c_new)
        # get_zk = Linear + ReLU
        z = jnp.maximum(
            jnp.dot(h_new, zkw_ref[...], preferred_element_type=f32) + zkb_ref[...],
            0.0)
        # packed heads: [ get_score (NUM_CLASSES) | update_m (6) ]
        head_out[...] = jnp.dot(z, hw_ref[...], preferred_element_type=f32) + hb_ref[...]
        hc_out[0] = h_new
        hc_out[1] = c_new


def rnn_step(x, h, c, pp):
    N = x.shape[0]
    ins = (x, h, c,
           pp["fc_w"], pp["fc_b"],
           pp["wih_i"], pp["wih_f"], pp["wih_g"], pp["wih_o"],
           pp["whh_i"], pp["whh_f"], pp["whh_g"], pp["whh_o"],
           pp["b_i"], pp["b_f"], pp["b_g"], pp["b_o"],
           pp["zk_w"], pp["zk_b"], pp["head_w"], pp["head_b"])
    in_specs = (
        [pl.BlockSpec((N, D_FLAT), lambda j: (0, 0)),                 # x  (loaded once)
         pl.BlockSpec((N, LSTM_HIDDEN), lambda j: (0, 0)),            # h
         pl.BlockSpec((N, LSTM_HIDDEN), lambda j: (0, 0)),            # c
         pl.BlockSpec((D_FLAT, TILE_F), lambda j: (0, j)),            # fc weight (streamed)
         pl.BlockSpec((1, TILE_F), lambda j: (0, j))]                 # fc bias   (streamed)
        + [pl.BlockSpec((TILE_F, LSTM_HIDDEN), lambda j: (j, 0))] * 4  # w_ih per gate (streamed)
        + [pl.BlockSpec((LSTM_HIDDEN, LSTM_HIDDEN), lambda j: (0, 0))] * 4
        + [pl.BlockSpec((1, LSTM_HIDDEN), lambda j: (0, 0))] * 4
        + [pl.BlockSpec((LSTM_HIDDEN, ZK_SIZE), lambda j: (0, 0)),
           pl.BlockSpec((1, ZK_SIZE), lambda j: (0, 0)),
           pl.BlockSpec((ZK_SIZE, HEADS), lambda j: (0, 0)),
           pl.BlockSpec((1, HEADS), lambda j: (0, 0))])
    out_shapes = (jax.ShapeDtypeStruct((2, N, LSTM_HIDDEN), f32),     # packed [h; c]
                  jax.ShapeDtypeStruct((N, HEADS), f32))              # packed [score | m6]
    out_specs = (pl.BlockSpec((2, N, LSTM_HIDDEN), lambda j: (0, 0, 0)),
                 pl.BlockSpec((N, HEADS), lambda j: (0, 0)))
    hc, head = pl.pallas_call(
        fc_lstm_head_kernel,
        out_shape=out_shapes,
        grid_spec=pltpu.PrefetchScalarGridSpec(
            num_scalar_prefetch=0, grid=(N_FTILES,),
            in_specs=in_specs, out_specs=out_specs,
            scratch_shapes=[pltpu.VMEM((N, LSTM_HIDDEN), f32)] * 4),
        compiler_params=pltpu.CompilerParams(dimension_semantics=("arbitrary",)),
    )(*ins)
    return hc[0], hc[1], head[:, :NUM_CLASSES], head[:, NUM_CLASSES:]


# --------------------- glue: bilinear sampling matrices ---------------------
def build_sampling_mats(theta):
    """Dense bilinear sampling matrices for affine_grid + grid_sample
    (bilinear, zeros padding, align_corners=True — old PyTorch default),
    stacked along rows for the 4 phases of the subsequent 2x2 max-pool.
    theta: (N, 2, 3) -> (N, 4*P, Q) float32."""
    N = theta.shape[0]
    xs = jnp.linspace(-1.0, 1.0, W).astype(f32)
    ys = jnp.linspace(-1.0, 1.0, H).astype(f32)
    t = theta.astype(f32)
    gx = (t[:, 0, 0][:, None, None] * xs[None, None, :]
          + t[:, 0, 1][:, None, None] * ys[None, :, None]
          + t[:, 0, 2][:, None, None])                       # (N, H, W)
    gy = (t[:, 1, 0][:, None, None] * xs[None, None, :]
          + t[:, 1, 1][:, None, None] * ys[None, :, None]
          + t[:, 1, 2][:, None, None])
    ix = (gx + 1.0) * (W - 1) / 2.0                           # input pixel coords
    iy = (gy + 1.0) * (H - 1) / 2.0

    def axis_weights(coord, size):
        c0 = jnp.floor(coord)
        w1 = coord - c0
        w0 = 1.0 - w1
        out = 0.0
        for cc, ww in ((c0, w0), (c0 + 1.0, w1)):
            valid = (cc >= 0) & (cc <= size - 1)
            idx = jnp.clip(cc, 0, size - 1).astype(jnp.int32)
            out = out + (jnp.where(valid, ww, 0.0)[..., None]
                         * jax.nn.one_hot(idx, size, dtype=f32))
        return out                                            # (N, H, W, size)

    RX = axis_weights(ix, W)                                  # weights over input x
    RY = axis_weights(iy, H)                                  # weights over input y
    mats = []
    for di in range(2):
        for dj in range(2):
            ry = RY[:, di::2, dj::2, :]                       # (N, HP, WP, H)
            rx = RX[:, di::2, dj::2, :]                       # (N, HP, WP, W)
            gfull = jnp.einsum('npqy,npqx->npqyx', ry, rx)    # (N, HP, WP, H, W)
            mats.append(gfull.reshape(N, P, Q))
    return jnp.concatenate(mats, axis=1)                      # (N, 4*P, Q)


# ------------------------------ parameters ----------------------------------
def init_params(key):
    ks = jax.random.split(key, 10)

    def unif(k, shape, fan_in):
        bound = 1.0 / float(fan_in) ** 0.5
        return jax.random.uniform(k, shape, f32, -bound, bound)

    fc_w = unif(ks[0], (FC_OUT, D_FLAT), D_FLAT)
    fc_b = unif(ks[1], (FC_OUT,), D_FLAT)
    w_ih = unif(ks[2], (4 * LSTM_HIDDEN, FC_OUT), LSTM_HIDDEN)
    w_hh = unif(ks[3], (4 * LSTM_HIDDEN, LSTM_HIDDEN), LSTM_HIDDEN)
    b_ih = unif(ks[4], (4 * LSTM_HIDDEN,), LSTM_HIDDEN)
    b_hh = unif(ks[5], (4 * LSTM_HIDDEN,), LSTM_HIDDEN)
    zk_w = unif(ks[6], (ZK_SIZE, LSTM_HIDDEN), LSTM_HIDDEN)
    zk_b = unif(ks[7], (ZK_SIZE,), LSTM_HIDDEN)
    sc_w = unif(ks[8], (NUM_CLASSES, ZK_SIZE), ZK_SIZE)
    sc_b = unif(ks[9], (NUM_CLASSES,), ZK_SIZE)
    um_w = jnp.zeros((6, ZK_SIZE), f32)                        # update_m.weight = 0
    um_b = jnp.array([1.0, 0.0, 0.0, 0.0, 1.0, 0.0], f32)      # update_m.bias
    # canonical ("x @ W") layout used by the pure-JAX reference
    return {
        "fc_w_t": fc_w.T, "fc_b": fc_b[None, :],
        "w_ih_t": w_ih.T, "w_hh_t": w_hh.T,
        "b_ih": b_ih[None, :], "b_hh": b_hh[None, :],
        "zk_w_t": zk_w.T, "zk_b": zk_b[None, :],
        "sc_w_t": sc_w.T, "sc_b": sc_b[None, :],
        "um_w_t": um_w.T, "um_b": um_b[None, :],
    }


def prepare_pallas_params(p):
    """Kernel-layout parameters derived from the canonical ones (all glue):
      * fc weight rows permuted from C-major (PyTorch flatten of (C,HP,WP))
        to P-major, matching the channel-last (N, P, C) pooled output.
      * LSTM weights split per gate (i,f,g,o) and the two biases pre-summed.
      * get_score / update_m weights concatenated into one packed head.
    """
    Hd = LSTM_HIDDEN
    fc_w_pm = (p["fc_w_t"].reshape(FEAT_C, P, FC_OUT)
               .transpose(1, 0, 2).reshape(D_FLAT, FC_OUT))
    b_comb = p["b_ih"] + p["b_hh"]                             # (1, 4*Hd)
    pp = {
        "fc_w": fc_w_pm, "fc_b": p["fc_b"],
        "zk_w": p["zk_w_t"], "zk_b": p["zk_b"],
        "head_w": jnp.concatenate([p["sc_w_t"], p["um_w_t"]], axis=1),
        "head_b": jnp.concatenate([p["sc_b"], p["um_b"]], axis=1),
    }
    for gi, name in enumerate("ifgo"):                         # PyTorch chunk order
        pp["wih_" + name] = p["w_ih_t"][:, gi * Hd:(gi + 1) * Hd]
        pp["whh_" + name] = p["w_hh_t"][:, gi * Hd:(gi + 1) * Hd]
        pp["b_" + name] = b_comb[:, gi * Hd:(gi + 1) * Hd]
    return pp


# ------------------------------ forward (Pallas) ----------------------------
def rma_forward(f_I, pallas_params, K=K_ITERS):
    """Equivalent of RMA_module.forward(f_I, return_whole_scores=False).
    Returns (fused_scores (N, num_classes), M (K+1, N, 2, 3))."""
    # TODO(synk): scores / M are initialized with torch.randn in the reference
    # but every read slot is overwritten before use, so the random init is not
    # reproduced.
    N = f_I.shape[0]
    # loop-invariant channel-last feature map, computed once
    f_T = f_I.reshape(N, FEAT_C, Q).transpose(0, 2, 1)        # (N, Q, C)
    h = jnp.zeros((N, LSTM_HIDDEN), f32)                      # init_hidden
    c = jnp.zeros((N, LSTM_HIDDEN), f32)
    M = [jnp.tile(jnp.array([[1.0, 0.0, 0.0], [0.0, 1.0, 0.0]], f32)[None],
                  (N, 1, 1))]                                 # M[0] = identity
    scores = []
    for k in range(K + 1):
        G = build_sampling_mats(M[k])                         # (N, 4P, Q)
        pooled = st_pool(f_T, G)                              # (N, P, C)
        x = pooled.reshape(N, D_FLAT)                         # P-major flatten (matches fc_w perm)
        h, c, score_k, m6 = rnn_step(x, h, c, pallas_params)
        if k != 0:
            scores.append(score_k)                            # scores[k-1]
        if k != K:
            m_next = m6.reshape(N, 2, 3)
            m_next = m_next.at[:, 0, 1].set(0.0).at[:, 1, 0].set(0.0)
            M.append(m_next)
    scores = jnp.stack(scores, 0)                             # (K, N, C)
    fused = jnp.max(scores, axis=0)                           # scores.max(0)[0]
    return fused, jnp.stack(M, 0)


# ----------------------- pure-JAX reference (for checking) ------------------
def _ref_grid_sample(x, theta):
    N, C, Hh, Ww = x.shape
    xs = jnp.linspace(-1.0, 1.0, Ww)
    ys = jnp.linspace(-1.0, 1.0, Hh)
    gx = (theta[:, 0, 0][:, None, None] * xs[None, None, :]
          + theta[:, 0, 1][:, None, None] * ys[None, :, None]
          + theta[:, 0, 2][:, None, None])
    gy = (theta[:, 1, 0][:, None, None] * xs[None, None, :]
          + theta[:, 1, 1][:, None, None] * ys[None, :, None]
          + theta[:, 1, 2][:, None, None])
    ix = (gx + 1.0) * (Ww - 1) / 2.0
    iy = (gy + 1.0) * (Hh - 1) / 2.0
    x0 = jnp.floor(ix)
    y0 = jnp.floor(iy)
    flat = x.reshape(N, C, Hh * Ww)
    out = 0.0
    for yc, wy in ((y0, 1.0 - (iy - y0)), (y0 + 1.0, iy - y0)):
        for xc, wx in ((x0, 1.0 - (ix - x0)), (x0 + 1.0, ix - x0)):
            valid = (xc >= 0) & (xc <= Ww - 1) & (yc >= 0) & (yc <= Hh - 1)
            xi = jnp.clip(xc, 0, Ww - 1).astype(jnp.int32)
            yi = jnp.clip(yc, 0, Hh - 1).astype(jnp.int32)
            idx = (yi * Ww + xi).reshape(N, Hh * Ww)
            g = jax.vmap(lambda fl, ii: fl[:, ii])(flat, idx)  # (N, C, H*W)
            w = jnp.where(valid, wy * wx, 0.0).reshape(N, 1, Hh * Ww)
            out = out + g * w
    return out.reshape(N, C, Hh, Ww)


def rma_forward_ref(f_I, p, K=K_ITERS):
    N = f_I.shape[0]
    h = jnp.zeros((N, LSTM_HIDDEN), f32)
    c = jnp.zeros((N, LSTM_HIDDEN), f32)
    M = [jnp.tile(jnp.array([[1.0, 0.0, 0.0], [0.0, 1.0, 0.0]], f32)[None], (N, 1, 1))]
    scores = []
    Hd = LSTM_HIDDEN
    for k in range(K + 1):
        s = _ref_grid_sample(f_I, M[k])
        pooled = s.reshape(N, FEAT_C, HP, 2, WP, 2).max(axis=(3, 5))
        x = pooled.reshape(N, -1)
        fc = x @ p["fc_w_t"] + p["fc_b"]
        gates = fc @ p["w_ih_t"] + p["b_ih"] + h @ p["w_hh_t"] + p["b_hh"]
        i_g = jax.nn.sigmoid(gates[:, :Hd])
        f_g = jax.nn.sigmoid(gates[:, Hd:2 * Hd])
        g_g = jnp.tanh(gates[:, 2 * Hd:3 * Hd])
        o_g = jax.nn.sigmoid(gates[:, 3 * Hd:])
        c = f_g * c + i_g * g_g
        h = o_g * jnp.tanh(c)
        z = jax.nn.relu(h @ p["zk_w_t"] + p["zk_b"])
        if k != 0:
            scores.append(z @ p["sc_w_t"] + p["sc_b"])
        if k != K:
            m_next = (z @ p["um_w_t"] + p["um_b"]).reshape(N, 2, 3)
            m_next = m_next.at[:, 0, 1].set(0.0).at[:, 1, 0].set(0.0)
            M.append(m_next)
    scores = jnp.stack(scores, 0)
    return jnp.max(scores, axis=0), jnp.stack(M, 0)


# ---------------------------------- main -------------------------------------
if __name__ == "__main__":
    key = jax.random.PRNGKey(0)
    k_x, k_p = jax.random.split(key)
    f_I = jax.random.normal(k_x, (BATCH, FEAT_C, H, W), f32)   # NCHW input
    params = init_params(k_p)
    pparams = prepare_pallas_params(params)

    fwd = jax.jit(rma_forward)                                 # one XLA program
    fused, M = fwd(f_I, pparams)
    jax.block_until_ready((fused, M))

    assert fused.shape == (BATCH, NUM_CLASSES)
    assert M.shape == (K_ITERS + 1, BATCH, 2, 3)

    fused_ref, M_ref = rma_forward_ref(f_I, params)
    if not (jnp.allclose(fused, fused_ref, atol=5e-2, rtol=5e-2)
            and jnp.allclose(M, M_ref, atol=5e-2, rtol=5e-2)):
        raise AssertionError("Pallas output mismatch vs pure-JAX reference")

    print("KERNEL_OK")
</pallas_src>

<mosaic_0001>
module attributes {stable_mosaic.version = 11 : i64} {
  func.func @st_pool_kernel(%arg0: i32, %arg1: memref<1x64x32xf32, #tpu.memory_space<vmem>>, %arg2: memref<1x64x64xf32, #tpu.memory_space<vmem>>, %arg3: memref<1x16x32xf32, #tpu.memory_space<vmem>>) attributes {dimension_semantics = [#tpu.dimension_semantics<parallel>], iteration_bounds = array<i64: 2>, scalar_prefetch = 0 : i64, scratch_operands = 0 : i64, tpu.core_type = #tpu.core_type<tc>, window_params = [{transform_indices = @transform_0, window_bounds = array<i64: 1, 64, 32>}, {transform_indices = @transform_1, window_bounds = array<i64: 1, 64, 64>}, {transform_indices = @transform_2, window_bounds = array<i64: 1, 16, 32>}]} {
    %c0 = arith.constant 0 : index
    %c0_0 = arith.constant 0 : index
    %c0_1 = arith.constant 0 : index
    %0 = vector.load %arg2[%c0, %c0_0, %c0_1] : memref<1x64x64xf32, #tpu.memory_space<vmem>>, vector<1x64x64xf32>
    %1 = vector.shape_cast %0 : vector<1x64x64xf32> to vector<64x64xf32>
    %c0_2 = arith.constant 0 : index
    %c0_3 = arith.constant 0 : index
    %c0_4 = arith.constant 0 : index
    %2 = vector.load %arg1[%c0_2, %c0_3, %c0_4] : memref<1x64x32xf32, #tpu.memory_space<vmem>>, vector<1x64x32xf32>
    %3 = vector.shape_cast %2 : vector<1x64x32xf32> to vector<64x32xf32>
    %cst = arith.constant dense<0.000000e+00> : vector<64x32xf32>
    %4 = tpu.matmul %1, %3, %cst {dimension_numbers = #tpu.dot_dimension_numbers<[1], [0], [0], [1], [0, 0, 1, 1], [], []>} : vector<64x64xf32>, vector<64x32xf32>, vector<64x32xf32> -> vector<64x32xf32>
    %5 = vector.extract_strided_slice %4 {offsets = [0, 0], sizes = [16, 32], strides = [1, 1]} : vector<64x32xf32> to vector<16x32xf32>
    %6 = vector.extract_strided_slice %4 {offsets = [16, 0], sizes = [16, 32], strides = [1, 1]} : vector<64x32xf32> to vector<16x32xf32>
    %7 = arith.maximumf %5, %6 : vector<16x32xf32>
    %8 = vector.extract_strided_slice %4 {offsets = [32, 0], sizes = [16, 32], strides = [1, 1]} : vector<64x32xf32> to vector<16x32xf32>
    %9 = vector.extract_strided_slice %4 {offsets = [48, 0], sizes = [16, 32], strides = [1, 1]} : vector<64x32xf32> to vector<16x32xf32>
    %10 = arith.maximumf %8, %9 : vector<16x32xf32>
    %11 = arith.maximumf %7, %10 : vector<16x32xf32>
    %c0_5 = arith.constant 0 : index
    %c0_6 = arith.constant 0 : index
    %c0_7 = arith.constant 0 : index
    %12 = vector.load %arg3[%c0_5, %c0_6, %c0_7] : memref<1x16x32xf32, #tpu.memory_space<vmem>>, vector<1x16x32xf32>
    %13 = vector.shape_cast %12 : vector<1x16x32xf32> to vector<16x32xf32>
    %14 = vector.shape_cast %11 : vector<16x32xf32> to vector<1x16x32xf32>
    tpu.vector_store %arg3[%c0_5, %c0_6, %c0_7], %14 {strides = array<i32>} : memref<1x16x32xf32, #tpu.memory_space<vmem>>, vector<1x16x32xf32>,
    return
  }
  func.func @transform_0(%arg0: i32) -> (i32, i32, i32) {
    %c0_i32 = arith.constant 0 : i32
    %c0_i32_0 = arith.constant 0 : i32
    %c0_i32_1 = arith.constant 0 : i32
    return %arg0, %c0_i32, %c0_i32_0 : i32, i32, i32
  }
  func.func @transform_1(%arg0: i32) -> (i32, i32, i32) {
    %c0_i32 = arith.constant 0 : i32
    %c0_i32_0 = arith.constant 0 : i32
    %c0_i32_1 = arith.constant 0 : i32
    return %arg0, %c0_i32, %c0_i32_0 : i32, i32, i32
  }
  func.func @transform_2(%arg0: i32) -> (i32, i32, i32) {
    %c0_i32 = arith.constant 0 : i32
    %c0_i32_0 = arith.constant 0 : i32
    %c0_i32_1 = arith.constant 0 : i32
    return %arg0, %c0_i32, %c0_i32_0 : i32, i32, i32
  }
}

module attributes {stable_mosaic.version = 11 : i64} {
  func.func @fc_lstm_head_kernel(%arg0: i32, %arg1: memref<2x512xf32, #tpu.memory_space<vmem>>, %arg2: memref<2x32xf32, #tpu.memory_space<vmem>>, %arg3: memref<2x32xf32, #tpu.memory_space<vmem>>, %arg4: memref<512x128xf32, #tpu.memory_space<vmem>>, %arg5: memref<1x128xf32, #tpu.memory_space<vmem>>, %arg6: memref<128x32xf32, #tpu.memory_space<vmem>>, %arg7: memref<128x32xf32, #tpu.memory_space<vmem>>, %arg8: memref<128x32xf32, #tpu.memory_space<vmem>>, %arg9: memref<128x32xf32, #tpu.memory_space<vmem>>, %arg10: memref<32x32xf32, #tpu.memory_space<vmem>>, %arg11: memref<32x32xf32, #tpu.memory_space<vmem>>, %arg12: memref<32x32xf32, #tpu.memory_space<vmem>>, %arg13: memref<32x32xf32, #tpu.memory_space<vmem>>, %arg14: memref<1x32xf32, #tpu.memory_space<vmem>>, %arg15: memref<1x32xf32, #tpu.memory_space<vmem>>, %arg16: memref<1x32xf32, #tpu.memory_space<vmem>>, %arg17: memref<1x32xf32, #tpu.memory_space<vmem>>, %arg18: memref<32x16xf32, #tpu.memory_space<vmem>>, %arg19: memref<1x16xf32, #tpu.memory_space<vmem>>, %arg20: memref<16x16xf32, #tpu.memory_space<vmem>>, %arg21: memref<1x16xf32, #tpu.memory_space<vmem>>, %arg22: memref<2x2x32xf32, #tpu.memory_space<vmem>>, %arg23: memref<2x16xf32, #tpu.memory_space<vmem>>, %arg24: memref<2x32xf32, #tpu.memory_space<vmem>>, %arg25: memref<2x32xf32, #tpu.memory_space<vmem>>, %arg26: memref<2x32xf32, #tpu.memory_space<vmem>>, %arg27: memref<2x32xf32, #tpu.memory_space<vmem>>) attributes {dimension_semantics = [#tpu.dimension_semantics<arbitrary>], iteration_bounds = array<i64: 1>, scalar_prefetch = 0 : i64, scratch_operands = 4 : i64, tpu.core_type = #tpu.core_type<tc>, window_params = [{pipeline_mode = #tpu.pipeline_mode<synchronous>, transform_indices = @transform_0, window_bounds = array<i64: 2, 512>}, {pipeline_mode = #tpu.pipeline_mode<synchronous>, transform_indices = @transform_1, window_bounds = array<i64: 2, 32>}, {pipeline_mode = #tpu.pipeline_mode<synchronous>, transform_indices = @transform_2, window_bounds = array<i64: 2, 32>}, {transform_indices = @transform_3, window_bounds = array<i64: 512, 128>}, {transform_indices = @transform_4, window_bounds = array<i64: 1, 128>}, {transform_indices = @transform_5, window_bounds = array<i64: 128, 32>}, {transform_indices = @transform_6, window_bounds = array<i64: 128, 32>}, {transform_indices = @transform_7, window_bounds = array<i64: 128, 32>}, {transform_indices = @transform_8, window_bounds = array<i64: 128, 32>}, {pipeline_mode = #tpu.pipeline_mode<synchronous>, transform_indices = @transform_9, window_bounds = array<i64: 32, 32>}, {pipeline_mode = #tpu.pipeline_mode<synchronous>, transform_indices = @transform_10, window_bounds = array<i64: 32, 32>}, {pipeline_mode = #tpu.pipeline_mode<synchronous>, transform_indices = @transform_11, window_bounds = array<i64: 32, 32>}, {pipeline_mode = #tpu.pipeline_mode<synchronous>, transform_indices = @transform_12, window_bounds = array<i64: 32, 32>}, {pipeline_mode = #tpu.pipeline_mode<synchronous>, transform_indices = @transform_13, window_bounds = array<i64: 1, 32>}, {pipeline_mode = #tpu.pipeline_mode<synchronous>, transform_indices = @transform_14, window_bounds = array<i64: 1, 32>}, {pipeline_mode = #tpu.pipeline_mode<synchronous>, transform_indices = @transform_15, window_bounds = array<i64: 1, 32>}, {pipeline_mode = #tpu.pipeline_mode<synchronous>, transform_indices = @transform_16, window_bounds = array<i64: 1, 32>}, {pipeline_mode = #tpu.pipeline_mode<synchronous>, transform_indices = @transform_17, window_bounds = array<i64: 32, 16>}, {pipeline_mode = #tpu.pipeline_mode<synchronous>, transform_indices = @transform_18, window_bounds = array<i64: 1, 16>}, {pipeline_mode = #tpu.pipeline_mode<synchronous>, transform_indices = @transform_19, window_bounds = array<i64: 16, 16>}, {pipeline_mode = #tpu.pipeline_mode<synchronous>, transform_indices = @transform_20, window_bounds = array<i64: 1, 16>}, {pipeline_mode = #tpu.pipeline_mode<synchronous>, transform_indices = @transform_21, window_bounds = array<i64: 2, 2, 32>}, {pipeline_mode = #tpu.pipeline_mode<synchronous>, transform_indices = @transform_22, window_bounds = array<i64: 2, 16>}]} {
    %c0_i32 = arith.constant 0 : i32
    %0 = arith.cmpi eq, %arg0, %c0_i32 : i32
    %1 = arith.extui %0 : i1 to i32
    %c0_i32_0 = arith.constant 0 : i32
    %2 = arith.cmpi ne, %1, %c0_i32_0 : i32
    scf.if %2 {
      %cst_36 = arith.constant 0.000000e+00 : f32
      %32 = vector.broadcast %cst_36 : f32 to vector<2x32xf32>
      %c0_37 = arith.constant 0 : index
      %c0_38 = arith.constant 0 : index
      %33 = vector.load %arg24[%c0_37, %c0_38] : memref<2x32xf32, #tpu.memory_space<vmem>>, vector<2x32xf32>
      tpu.vector_store %arg24[%c0_37, %c0_38], %32 {strides = array<i32>} : memref<2x32xf32, #tpu.memory_space<vmem>>, vector<2x32xf32>,
      %cst_39 = arith.constant 0.000000e+00 : f32
      %34 = vector.broadcast %cst_39 : f32 to vector<2x32xf32>
      %c0_40 = arith.constant 0 : index
      %c0_41 = arith.constant 0 : index
      %35 = vector.load %arg25[%c0_40, %c0_41] : memref<2x32xf32, #tpu.memory_space<vmem>>, vector<2x32xf32>
      tpu.vector_store %arg25[%c0_40, %c0_41], %34 {strides = array<i32>} : memref<2x32xf32, #tpu.memory_space<vmem>>, vector<2x32xf32>,
      %cst_42 = arith.constant 0.000000e+00 : f32
      %36 = vector.broadcast %cst_42 : f32 to vector<2x32xf32>
      %c0_43 = arith.constant 0 : index
      %c0_44 = arith.constant 0 : index
      %37 = vector.load %arg26[%c0_43, %c0_44] : memref<2x32xf32, #tpu.memory_space<vmem>>, vector<2x32xf32>
      tpu.vector_store %arg26[%c0_43, %c0_44], %36 {strides = array<i32>} : memref<2x32xf32, #tpu.memory_space<vmem>>, vector<2x32xf32>,
      %cst_45 = arith.constant 0.000000e+00 : f32
      %38 = vector.broadcast %cst_45 : f32 to vector<2x32xf32>
      %c0_46 = arith.constant 0 : index
      %c0_47 = arith.constant 0 : index
      %39 = vector.load %arg27[%c0_46, %c0_47] : memref<2x32xf32, #tpu.memory_space<vmem>>, vector<2x32xf32>
      tpu.vector_store %arg27[%c0_46, %c0_47], %38 {strides = array<i32>} : memref<2x32xf32, #tpu.memory_space<vmem>>, vector<2x32xf32>,
    } else {
    }
    %c0 = arith.constant 0 : index
    %c0_1 = arith.constant 0 : index
    %3 = vector.load %arg1[%c0, %c0_1] : memref<2x512xf32, #tpu.memory_space<vmem>>, vector<2x512xf32>
    %c0_2 = arith.constant 0 : index
    %c0_3 = arith.constant 0 : index
    %4 = vector.load %arg4[%c0_2, %c0_3] : memref<512x128xf32, #tpu.memory_space<vmem>>, vector<512x128xf32>
    %cst = arith.constant dense<0.000000e+00> : vector<2x128xf32>
    %5 = tpu.matmul %3, %4, %cst {dimension_numbers = #tpu.dot_dimension_numbers<[1], [0], [0], [1], [0, 0, 1, 1], [], []>} : vector<2x512xf32>, vector<512x128xf32>, vector<2x128xf32> -> vector<2x128xf32>
    %c0_4 = arith.constant 0 : index
    %c0_5 = arith.constant 0 : index
    %6 = vector.load %arg5[%c0_4, %c0_5] : memref<1x128xf32, #tpu.memory_space<vmem>>, vector<1x128xf32>
    %7 = vector.broadcast %6 : vector<1x128xf32> to vector<2x128xf32>
    %8 = arith.addf %5, %7 : vector<2x128xf32>
    %c0_6 = arith.constant 0 : index
    %c0_7 = arith.constant 0 : index
    %9 = vector.load %arg24[%c0_6, %c0_7] : memref<2x32xf32, #tpu.memory_space<vmem>>, vector<2x32xf32>
    %c0_8 = arith.constant 0 : index
    %c0_9 = arith.constant 0 : index
    %10 = vector.load %arg6[%c0_8, %c0_9] : memref<128x32xf32, #tpu.memory_space<vmem>>, vector<128x32xf32>
    %cst_10 = arith.constant dense<0.000000e+00> : vector<2x32xf32>
    %11 = tpu.matmul %8, %10, %cst_10 {dimension_numbers = #tpu.dot_dimension_numbers<[1], [0], [0], [1], [0, 0, 1, 1], [], []>} : vector<2x128xf32>, vector<128x32xf32>, vector<2x32xf32> -> vector<2x32xf32>
    %12 = arith.addf %9, %11 : vector<2x32xf32>
    %c0_11 = arith.constant 0 : index
    %c0_12 = arith.constant 0 : index
    %13 = vector.load %arg24[%c0_11, %c0_12] : memref<2x32xf32, #tpu.memory_space<vmem>>, vector<2x32xf32>
    tpu.vector_store %arg24[%c0_11, %c0_12], %12 {strides = array<i32>} : memref<2x32xf32, #tpu.memory_space<vmem>>, vector<2x32xf32>,
    %c0_13 = arith.constant 0 : index
    %c0_14 = arith.constant 0 : index
    %14 = vector.load %arg25[%c0_13, %c0_14] : memref<2x32xf32, #tpu.memory_space<vmem>>, vector<2x32xf32>
    %c0_15 = arith.constant 0 : index
    %c0_16 = arith.constant 0 : index
    %15 = vector.load %arg7[%c0_15, %c0_16] : memref<128x32xf32, #tpu.memory_space<vmem>>, vector<128x32xf32>
    %cst_17 = arith.constant dense<0.000000e+00> : vector<2x32xf32>
    %16 = tpu.matmul %8, %15, %cst_17 {dimension_numbers = #tpu.dot_dimension_numbers<[1], [0], [0], [1], [0, 0, 1, 1], [], []>} : vector<2x128xf32>, vector<128x32xf32>, vector<2x32xf32> -> vector<2x32xf32>
    %17 = arith.addf %14, %16 : vector<2x32xf32>
    %c0_18 = arith.constant 0 : index
    %c0_19 = arith.constant 0 : index
    %18 = vector.load %arg25[%c0_18, %c0_19] : memref<2x32xf32, #tpu.memory_space<vmem>>, vector<2x32xf32>
    tpu.vector_store %arg25[%c0_18, %c0_19], %17 {strides = array<i32>} : memref<2x32xf32, #tpu.memory_space<vmem>>, vector<2x32xf32>,
    %c0_20 = arith.constant 0 : index
    %c0_21 = arith.constant 0 : index
    %19 = vector.load %arg26[%c0_20, %c0_21] : memref<2x32xf32, #tpu.memory_space<vmem>>, vector<2x32xf32>
    %c0_22 = arith.constant 0 : index
    %c0_23 = arith.constant 0 : index
    %20 = vector.load %arg8[%c0_22, %c0_23] : memref<128x32xf32, #tpu.memory_space<vmem>>, vector<128x32xf32>
    %cst_24 = arith.constant dense<0.000000e+00> : vector<2x32xf32>
    %21 = tpu.matmul %8, %20, %cst_24 {dimension_numbers = #tpu.dot_dimension_numbers<[1], [0], [0], [1], [0, 0, 1, 1], [], []>} : vector<2x128xf32>, vector<128x32xf32>, vector<2x32xf32> -> vector<2x32xf32>
    %22 = arith.addf %19, %21 : vector<2x32xf32>
    %c0_25 = arith.constant 0 : index
    %c0_26 = arith.constant 0 : index
    %23 = vector.load %arg26[%c0_25, %c0_26] : memref<2x32xf32, #tpu.memory_space<vmem>>, vector<2x32xf32>
    tpu.vector_store %arg26[%c0_25, %c0_26], %22 {strides = array<i32>} : memref<2x32xf32, #tpu.memory_space<vmem>>, vector<2x32xf32>,
    %c0_27 = arith.constant 0 : index
    %c0_28 = arith.constant 0 : index
    %24 = vector.load %arg27[%c0_27, %c0_28] : memref<2x32xf32, #tpu.memory_space<vmem>>, vector<2x32xf32>
    %c0_29 = arith.constant 0 : index
    %c0_30 = arith.constant 0 : index
    %25 = vector.load %arg9[%c0_29, %c0_30] : memref<128x32xf32, #tpu.memory_space<vmem>>, vector<128x32xf32>
    %cst_31 = arith.constant dense<0.000000e+00> : vector<2x32xf32>
    %26 = tpu.matmul %8, %25, %cst_31 {dimension_numbers = #tpu.dot_dimension_numbers<[1], [0], [0], [1], [0, 0, 1, 1], [], []>} : vector<2x128xf32>, vector<128x32xf32>, vector<2x32xf32> -> vector<2x32xf32>
    %27 = arith.addf %24, %26 : vector<2x32xf32>
    %c0_32 = arith.constant 0 : index
    %c0_33 = arith.constant 0 : index
    %28 = vector.load %arg27[%c0_32, %c0_33] : memref<2x32xf32, #tpu.memory_space<vmem>>, vector<2x32xf32>
    tpu.vector_store %arg27[%c0_32, %c0_33], %27 {strides = array<i32>} : memref<2x32xf32, #tpu.memory_space<vmem>>, vector<2x32xf32>,
    %c0_i32_34 = arith.constant 0 : i32
    %29 = arith.cmpi eq, %arg0, %c0_i32_34 : i32
    %30 = arith.extui %29 : i1 to i32
    %c0_i32_35 = arith.constant 0 : i32
    %31 = arith.cmpi ne, %30, %c0_i32_35 : i32
    scf.if %31 {
      %c0_36 = arith.constant 0 : index
      %c0_37 = arith.constant 0 : index
      %32 = vector.load %arg2[%c0_36, %c0_37] : memref<2x32xf32, #tpu.memory_space<vmem>>, vector<2x32xf32>
      %c0_38 = arith.constant 0 : index
      %c0_39 = arith.constant 0 : index
      %33 = vector.load %arg3[%c0_38, %c0_39] : memref<2x32xf32, #tpu.memory_space<vmem>>, vector<2x32xf32>
      %c0_40 = arith.constant 0 : index
      %c0_41 = arith.constant 0 : index
      %34 = vector.load %arg24[%c0_40, %c0_41] : memref<2x32xf32, #tpu.memory_space<vmem>>, vector<2x32xf32>
      %c0_42 = arith.constant 0 : index
      %c0_43 = arith.constant 0 : index
      %35 = vector.load %arg10[%c0_42, %c0_43] : memref<32x32xf32, #tpu.memory_space<vmem>>, vector<32x32xf32>
      %cst_44 = arith.constant dense<0.000000e+00> : vector<2x32xf32>
      %36 = tpu.matmul %32, %35, %cst_44 {dimension_numbers = #tpu.dot_dimension_numbers<[1], [0], [0], [1], [0, 0, 1, 1], [], []>} : vector<2x32xf32>, vector<32x32xf32>, vector<2x32xf32> -> vector<2x32xf32>
      %37 = arith.addf %34, %36 : vector<2x32xf32>
      %c0_45 = arith.constant 0 : index
      %c0_46 = arith.constant 0 : index
      %38 = vector.load %arg14[%c0_45, %c0_46] : memref<1x32xf32, #tpu.memory_space<vmem>>, vector<1x32xf32>
      %39 = vector.broadcast %38 : vector<1x32xf32> to vector<2x32xf32>
      %40 = arith.addf %37, %39 : vector<2x32xf32>
      %cst_47 = arith.constant 5.000000e-01 : f32
      %41 = vector.broadcast %cst_47 : f32 to vector<2x32xf32>
      %42 = arith.mulf %41, %40 : vector<2x32xf32>
      %43 = math.tanh %42 : vector<2x32xf32>
      %cst_48 = arith.constant 1.000000e+00 : f32
      %44 = vector.broadcast %cst_48 : f32 to vector<2x32xf32>
      %45 = arith.addf %43, %44 : vector<2x32xf32>
      %cst_49 = arith.constant 5.000000e-01 : f32
      %46 = vector.broadcast %cst_49 : f32 to vector<2x32xf32>
      %47 = arith.mulf %46, %45 : vector<2x32xf32>
      %c0_50 = arith.constant 0 : index
      %c0_51 = arith.constant 0 : index
      %48 = vector.load %arg25[%c0_50, %c0_51] : memref<2x32xf32, #tpu.memory_space<vmem>>, vector<2x32xf32>
      %c0_52 = arith.constant 0 : index
      %c0_53 = arith.constant 0 : index
      %49 = vector.load %arg11[%c0_52, %c0_53] : memref<32x32xf32, #tpu.memory_space<vmem>>, vector<32x32xf32>
      %cst_54 = arith.constant dense<0.000000e+00> : vector<2x32xf32>
      %50 = tpu.matmul %32, %49, %cst_54 {dimension_numbers = #tpu.dot_dimension_numbers<[1], [0], [0], [1], [0, 0, 1, 1], [], []>} : vector<2x32xf32>, vector<32x32xf32>, vector<2x32xf32> -> vector<2x32xf32>
      %51 = arith.addf %48, %50 : vector<2x32xf32>
      %c0_55 = arith.constant 0 : index
      %c0_56 = arith.constant 0 : index
      %52 = vector.load %arg15[%c0_55, %c0_56] : memref<1x32xf32, #tpu.memory_space<vmem>>, vector<1x32xf32>
      %53 = vector.broadcast %52 : vector<1x32xf32> to vector<2x32xf32>
      %54 = arith.addf %51, %53 : vector<2x32xf32>
      %cst_57 = arith.constant 5.000000e-01 : f32
      %55 = vector.broadcast %cst_57 : f32 to vector<2x32xf32>
      %56 = arith.mulf %55, %54 : vector<2x32xf32>
      %57 = math.tanh %56 : vector<2x32xf32>
      %cst_58 = arith.constant 1.000000e+00 : f32
      %58 = vector.broadcast %cst_58 : f32 to vector<2x32xf32>
      %59 = arith.addf %57, %58 : vector<2x32xf32>
      %cst_59 = arith.constant 5.000000e-01 : f32
      %60 = vector.broadcast %cst_59 : f32 to vector<2x32xf32>
      %61 = arith.mulf %60, %59 : vector<2x32xf32>
      %c0_60 = arith.constant 0 : index
      %c0_61 = arith.constant 0 : index
      %62 = vector.load %arg26[%c0_60, %c0_61] : memref<2x32xf32, #tpu.memory_space<vmem>>, vector<2x32xf32>
      %c0_62 = arith.constant 0 : index
      %c0_63 = arith.constant 0 : index
      %63 = vector.load %arg12[%c0_62, %c0_63] : memref<32x32xf32, #tpu.memory_space<vmem>>, vector<32x32xf32>
      %cst_64 = arith.constant dense<0.000000e+00> : vector<2x32xf32>
      %64 = tpu.matmul %32, %63, %cst_64 {dimension_numbers = #tpu.dot_dimension_numbers<[1], [0], [0], [1], [0, 0, 1, 1], [], []>} : vector<2x32xf32>, vector<32x32xf32>, vector<2x32xf32> -> vector<2x32xf32>
      %65 = arith.addf %62, %64 : vector<2x32xf32>
      %c0_65 = arith.constant 0 : index
      %c0_66 = arith.constant 0 : index
      %66 = vector.load %arg16[%c0_65, %c0_66] : memref<1x32xf32, #tpu.memory_space<vmem>>, vector<1x32xf32>
      %67 = vector.broadcast %66 : vector<1x32xf32> to vector<2x32xf32>
      %68 = arith.addf %65, %67 : vector<2x32xf32>
      %69 = math.tanh %68 : vector<2x32xf32>
      %c0_67 = arith.constant 0 : index
      %c0_68 = arith.constant 0 : index
      %70 = vector.load %arg27[%c0_67, %c0_68] : memref<2x32xf32, #tpu.memory_space<vmem>>, vector<2x32xf32>
      %c0_69 = arith.constant 0 : index
      %c0_70 = arith.constant 0 : index
      %71 = vector.load %arg13[%c0_69, %c0_70] : memref<32x32xf32, #tpu.memory_space<vmem>>, vector<32x32xf32>
      %cst_71 = arith.constant dense<0.000000e+00> : vector<2x32xf32>
      %72 = tpu.matmul %32, %71, %cst_71 {dimension_numbers = #tpu.dot_dimension_numbers<[1], [0], [0], [1], [0, 0, 1, 1], [], []>} : vector<2x32xf32>, vector<32x32xf32>, vector<2x32xf32> -> vector<2x32xf32>
      %73 = arith.addf %70, %72 : vector<2x32xf32>
      %c0_72 = arith.constant 0 : index
      %c0_73 = arith.constant 0 : index
      %74 = vector.load %arg17[%c0_72, %c0_73] : memref<1x32xf32, #tpu.memory_space<vmem>>, vector<1x32xf32>
      %75 = vector.broadcast %74 : vector<1x32xf32> to vector<2x32xf32>
      %76 = arith.addf %73, %75 : vector<2x32xf32>
      %cst_74 = arith.constant 5.000000e-01 : f32
      %77 = vector.broadcast %cst_74 : f32 to vector<2x32xf32>
      %78 = arith.mulf %77, %76 : vector<2x32xf32>
      %79 = math.tanh %78 : vector<2x32xf32>
      %cst_75 = arith.constant 1.000000e+00 : f32
      %80 = vector.broadcast %cst_75 : f32 to vector<2x32xf32>
      %81 = arith.addf %79, %80 : vector<2x32xf32>
      %cst_76 = arith.constant 5.000000e-01 : f32
      %82 = vector.broadcast %cst_76 : f32 to vector<2x32xf32>
      %83 = arith.mulf %82, %81 : vector<2x32xf32>
      %84 = arith.mulf %61, %33 : vector<2x32xf32>
      %85 = arith.mulf %47, %69 : vector<2x32xf32>
      %86 = arith.addf %84, %85 : vector<2x32xf32>
      %87 = math.tanh %86 : vector<2x32xf32>
      %88 = arith.mulf %83, %87 : vector<2x32xf32>
      %c0_77 = arith.constant 0 : index
      %c0_78 = arith.constant 0 : index
      %89 = vector.load %arg18[%c0_77, %c0_78] : memref<32x16xf32, #tpu.memory_space<vmem>>, vector<32x16xf32>
      %cst_79 = arith.constant dense<0.000000e+00> : vector<2x16xf32>
      %90 = tpu.matmul %88, %89, %cst_79 {dimension_numbers = #tpu.dot_dimension_numbers<[1], [0], [0], [1], [0, 0, 1, 1], [], []>} : vector<2x32xf32>, vector<32x16xf32>, vector<2x16xf32> -> vector<2x16xf32>
      %c0_80 = arith.constant 0 : index
      %c0_81 = arith.constant 0 : index
      %91 = vector.load %arg19[%c0_80, %c0_81] : memref<1x16xf32, #tpu.memory_space<vmem>>, vector<1x16xf32>
      %92 = vector.broadcast %91 : vector<1x16xf32> to vector<2x16xf32>
      %93 = arith.addf %90, %92 : vector<2x16xf32>
      %cst_82 = arith.constant 0.000000e+00 : f32
      %94 = vector.broadcast %cst_82 : f32 to vector<2x16xf32>
      %95 = arith.maximumf %93, %94 : vector<2x16xf32>
      %c0_83 = arith.constant 0 : index
      %c0_84 = arith.constant 0 : index
      %96 = vector.load %arg20[%c0_83, %c0_84] : memref<16x16xf32, #tpu.memory_space<vmem>>, vector<16x16xf32>
      %cst_85 = arith.constant dense<0.000000e+00> : vector<2x16xf32>
      %97 = tpu.matmul %95, %96, %cst_85 {dimension_numbers = #tpu.dot_dimension_numbers<[1], [0], [0], [1], [0, 0, 1, 1], [], []>} : vector<2x16xf32>, vector<16x16xf32>, vector<2x16xf32> -> vector<2x16xf32>
      %c0_86 = arith.constant 0 : index
      %c0_87 = arith.constant 0 : index
      %98 = vector.load %arg21[%c0_86, %c0_87] : memref<1x16xf32, #tpu.memory_space<vmem>>, vector<1x16xf32>
      %99 = vector.broadcast %98 : vector<1x16xf32> to vector<2x16xf32>
      %100 = arith.addf %97, %99 : vector<2x16xf32>
      %c0_88 = arith.constant 0 : index
      %c0_89 = arith.constant 0 : index
      %101 = vector.load %arg23[%c0_88, %c0_89] : memref<2x16xf32, #tpu.memory_space<vmem>>, vector<2x16xf32>
      tpu.vector_store %arg23[%c0_88, %c0_89], %100 {strides = array<i32>} : memref<2x16xf32, #tpu.memory_space<vmem>>, vector<2x16xf32>,
      %c0_90 = arith.constant 0 : index
      %c0_91 = arith.constant 0 : index
      %c0_92 = arith.constant 0 : index
      %102 = vector.load %arg22[%c0_90, %c0_91, %c0_92] : memref<2x2x32xf32, #tpu.memory_space<vmem>>, vector<1x2x32xf32>
      %103 = vector.shape_cast %102 : vector<1x2x32xf32> to vector<2x32xf32>
      %104 = vector.shape_cast %88 : vector<2x32xf32> to vector<1x2x32xf32>
      tpu.vector_store %arg22[%c0_90, %c0_91, %c0_92], %104 {strides = array<i32>} : memref<2x2x32xf32, #tpu.memory_space<vmem>>, vector<1x2x32xf32>,
      %c1 = arith.constant 1 : index
      %c0_93 = arith.constant 0 : index
      %c0_94 = arith.constant 0 : index
      %105 = vector.load %arg22[%c1, %c0_93, %c0_94] : memref<2x2x32xf32, #tpu.memory_space<vmem>>, vector<1x2x32xf32>
      %106 = vector.shape_cast %105 : vector<1x2x32xf32> to vector<2x32xf32>
      %107 = vector.shape_cast %86 : vector<2x32xf32> to vector<1x2x32xf32>
      tpu.vector_store %arg22[%c1, %c0_93, %c0_94], %107 {strides = array<i32>} : memref<2x2x32xf32, #tpu.memory_space<vmem>>, vector<1x2x32xf32>,
    } else {
    }
    return
  }
  func.func @transform_0(%arg0: i32) -> (i32, i32) {
    %c0_i32 = arith.constant 0 : i32
    %c0_i32_0 = arith.constant 0 : i32
    %c0_i32_1 = arith.constant 0 : i32
    return %c0_i32, %c0_i32_0 : i32, i32
  }
  func.func @transform_1(%arg0: i32) -> (i32, i32) {
    %c0_i32 = arith.constant 0 : i32
    %c0_i32_0 = arith.constant 0 : i32
    %c0_i32_1 = arith.constant 0 : i32
    return %c0_i32, %c0_i32_0 : i32, i32
  }
  func.func @transform_2(%arg0: i32) -> (i32, i32) {
    %c0_i32 = arith.constant 0 : i32
    %c0_i32_0 = arith.constant 0 : i32
    %c0_i32_1 = arith.constant 0 : i32
    return %c0_i32, %c0_i32_0 : i32, i32
  }
  func.func @transform_3(%arg0: i32) -> (i32, i32) {
    %c0_i32 = arith.constant 0 : i32
    %c0_i32_0 = arith.constant 0 : i32
    return %c0_i32, %arg0 : i32, i32
  }
  func.func @transform_4(%arg0: i32) -> (i32, i32) {
    %c0_i32 = arith.constant 0 : i32
    %c0_i32_0 = arith.constant 0 : i32
    return %c0_i32, %arg0 : i32, i32
  }
  func.func @transform_5(%arg0: i32) -> (i32, i32) {
    %c0_i32 = arith.constant 0 : i32
    %c0_i32_0 = arith.constant 0 : i32
    return %arg0, %c0_i32 : i32, i32
  }
  func.func @transform_6(%arg0: i32) -> (i32, i32) {
    %c0_i32 = arith.constant 0 : i32
    %c0_i32_0 = arith.constant 0 : i32
    return %arg0, %c0_i32 : i32, i32
  }
  func.func @transform_7(%arg0: i32) -> (i32, i32) {
    %c0_i32 = arith.constant 0 : i32
    %c0_i32_0 = arith.constant 0 : i32
    return %arg0, %c0_i32 : i32, i32
  }
  func.func @transform_8(%arg0: i32) -> (i32, i32) {
    %c0_i32 = arith.constant 0 : i32
    %c0_i32_0 = arith.constant 0 : i32
    return %arg0, %c0_i32 : i32, i32
  }
  func.func @transform_9(%arg0: i32) -> (i32, i32) {
    %c0_i32 = arith.constant 0 : i32
    %c0_i32_0 = arith.constant 0 : i32
    %c0_i32_1 = arith.constant 0 : i32
    return %c0_i32, %c0_i32_0 : i32, i32
  }
  func.func @transform_10(%arg0: i32) -> (i32, i32) {
    %c0_i32 = arith.constant 0 : i32
    %c0_i32_0 = arith.constant 0 : i32
    %c0_i32_1 = arith.constant 0 : i32
    return %c0_i32, %c0_i32_0 : i32, i32
  }
  func.func @transform_11(%arg0: i32) -> (i32, i32) {
    %c0_i32 = arith.constant 0 : i32
    %c0_i32_0 = arith.constant 0 : i32
    %c0_i32_1 = arith.constant 0 : i32
    return %c0_i32, %c0_i32_0 : i32, i32
  }
  func.func @transform_12(%arg0: i32) -> (i32, i32) {
    %c0_i32 = arith.constant 0 : i32
    %c0_i32_0 = arith.constant 0 : i32
    %c0_i32_1 = arith.constant 0 : i32
    return %c0_i32, %c0_i32_0 : i32, i32
  }
  func.func @transform_13(%arg0: i32) -> (i32, i32) {
    %c0_i32 = arith.constant 0 : i32
    %c0_i32_0 = arith.constant 0 : i32
    %c0_i32_1 = arith.constant 0 : i32
    return %c0_i32, %c0_i32_0 : i32, i32
  }
  func.func @transform_14(%arg0: i32) -> (i32, i32) {
    %c0_i32 = arith.constant 0 : i32
    %c0_i32_0 = arith.constant 0 : i32
    %c0_i32_1 = arith.constant 0 : i32
    return %c0_i32, %c0_i32_0 : i32, i32
  }
  func.func @transform_15(%arg0: i32) -> (i32, i32) {
    %c0_i32 = arith.constant 0 : i32
    %c0_i32_0 = arith.constant 0 : i32
    %c0_i32_1 = arith.constant 0 : i32
    return %c0_i32, %c0_i32_0 : i32, i32
  }
  func.func @transform_16(%arg0: i32) -> (i32, i32) {
    %c0_i32 = arith.constant 0 : i32
    %c0_i32_0 = arith.constant 0 : i32
    %c0_i32_1 = arith.constant 0 : i32
    return %c0_i32, %c0_i32_0 : i32, i32
  }
  func.func @transform_17(%arg0: i32) -> (i32, i32) {
    %c0_i32 = arith.constant 0 : i32
    %c0_i32_0 = arith.constant 0 : i32
    %c0_i32_1 = arith.constant 0 : i32
    return %c0_i32, %c0_i32_0 : i32, i32
  }
  func.func @transform_18(%arg0: i32) -> (i32, i32) {
    %c0_i32 = arith.constant 0 : i32
    %c0_i32_0 = arith.constant 0 : i32
    %c0_i32_1 = arith.constant 0 : i32
    return %c0_i32, %c0_i32_0 : i32, i32
  }
  func.func @transform_19(%arg0: i32) -> (i32, i32) {
    %c0_i32 = arith.constant 0 : i32
    %c0_i32_0 = arith.constant 0 : i32
    %c0_i32_1 = arith.constant 0 : i32
    return %c0_i32, %c0_i32_0 : i32, i32
  }
  func.func @transform_20(%arg0: i32) -> (i32, i32) {
    %c0_i32 = arith.constant 0 : i32
    %c0_i32_0 = arith.constant 0 : i32
    %c0_i32_1 = arith.constant 0 : i32
    return %c0_i32, %c0_i32_0 : i32, i32
  }
  func.func @transform_21(%arg0: i32) -> (i32, i32, i32) {
    %c0_i32 = arith.constant 0 : i32
    %c0_i32_0 = arith.constant 0 : i32
    %c0_i32_1 = arith.constant 0 : i32
    %c0_i32_2 = arith.constant 0 : i32
    return %c0_i32, %c0_i32_0, %c0_i32_1 : i32, i32, i32
  }
  func.func @transform_22(%arg0: i32) -> (i32, i32) {
    %c0_i32 = arith.constant 0 : i32
    %c0_i32_0 = arith.constant 0 : i32
    %c0_i32_1 = arith.constant 0 : i32
    return %c0_i32, %c0_i32_0 : i32, i32
  }
}

module attributes {stable_mosaic.version = 11 : i64} {
  func.func @fc_lstm_head_kernel(%arg0: i32, %arg1: memref<2x512xf32, #tpu.memory_space<vmem>>, %arg2: memref<2x32xf32, #tpu.memory_space<vmem>>, %arg3: memref<2x32xf32, #tpu.memory_space<vmem>>, %arg4: memref<512x128xf32, #tpu.memory_space<vmem>>, %arg5: memref<1x128xf32, #tpu.memory_space<vmem>>, %arg6: memref<128x32xf32, #tpu.memory_space<vmem>>, %arg7: memref<128x32xf32, #tpu.memory_space<vmem>>, %arg8: memref<128x32xf32, #tpu.memory_space<vmem>>, %arg9: memref<128x32xf32, #tpu.memory_space<vmem>>, %arg10: memref<32x32xf32, #tpu.memory_space<vmem>>, %arg11: memref<32x32xf32, #tpu.memory_space<vmem>>, %arg12: memref<32x32xf32, #tpu.memory_space<vmem>>, %arg13: memref<32x32xf32, #tpu.memory_space<vmem>>, %arg14: memref<1x32xf32, #tpu.memory_space<vmem>>, %arg15: memref<1x32xf32, #tpu.memory_space<vmem>>, %arg16: memref<1x32xf32, #tpu.memory_space<vmem>>, %arg17: memref<1x32xf32, #tpu.memory_space<vmem>>, %arg18: memref<32x16xf32, #tpu.memory_space<vmem>>, %arg19: memref<1x16xf32, #tpu.memory_space<vmem>>, %arg20: memref<16x16xf32, #tpu.memory_space<vmem>>, %arg21: memref<1x16xf32, #tpu.memory_space<vmem>>, %arg22: memref<2x2x32xf32, #tpu.memory_space<vmem>>, %arg23: memref<2x16xf32, #tpu.memory_space<vmem>>, %arg24: memref<2x32xf32, #tpu.memory_space<vmem>>, %arg25: memref<2x32xf32, #tpu.memory_space<vmem>>, %arg26: memref<2x32xf32, #tpu.memory_space<vmem>>, %arg27: memref<2x32xf32, #tpu.memory_space<vmem>>) attributes {dimension_semantics = [#tpu.dimension_semantics<arbitrary>], iteration_bounds = array<i64: 1>, scalar_prefetch = 0 : i64, scratch_operands = 4 : i64, tpu.core_type = #tpu.core_type<tc>, window_params = [{pipeline_mode = #tpu.pipeline_mode<synchronous>, transform_indices = @transform_0, window_bounds = array<i64: 2, 512>}, {pipeline_mode = #tpu.pipeline_mode<synchronous>, transform_indices = @transform_1, window_bounds = array<i64: 2, 32>}, {pipeline_mode = #tpu.pipeline_mode<synchronous>, transform_indices = @transform_2, window_bounds = array<i64: 2, 32>}, {transform_indices = @transform_3, window_bounds = array<i64: 512, 128>}, {transform_indices = @transform_4, window_bounds = array<i64: 1, 128>}, {transform_indices = @transform_5, window_bounds = array<i64: 128, 32>}, {transform_indices = @transform_6, window_bounds = array<i64: 128, 32>}, {transform_indices = @transform_7, window_bounds = array<i64: 128, 32>}, {transform_indices = @transform_8, window_bounds = array<i64: 128, 32>}, {pipeline_mode = #tpu.pipeline_mode<synchronous>, transform_indices = @transform_9, window_bounds = array<i64: 32, 32>}, {pipeline_mode = #tpu.pipeline_mode<synchronous>, transform_indices = @transform_10, window_bounds = array<i64: 32, 32>}, {pipeline_mode = #tpu.pipeline_mode<synchronous>, transform_indices = @transform_11, window_bounds = array<i64: 32, 32>}, {pipeline_mode = #tpu.pipeline_mode<synchronous>, transform_indices = @transform_12, window_bounds = array<i64: 32, 32>}, {pipeline_mode = #tpu.pipeline_mode<synchronous>, transform_indices = @transform_13, window_bounds = array<i64: 1, 32>}, {pipeline_mode = #tpu.pipeline_mode<synchronous>, transform_indices = @transform_14, window_bounds = array<i64: 1, 32>}, {pipeline_mode = #tpu.pipeline_mode<synchronous>, transform_indices = @transform_15, window_bounds = array<i64: 1, 32>}, {pipeline_mode = #tpu.pipeline_mode<synchronous>, transform_indices = @transform_16, window_bounds = array<i64: 1, 32>}, {pipeline_mode = #tpu.pipeline_mode<synchronous>, transform_indices = @transform_17, window_bounds = array<i64: 32, 16>}, {pipeline_mode = #tpu.pipeline_mode<synchronous>, transform_indices = @transform_18, window_bounds = array<i64: 1, 16>}, {pipeline_mode = #tpu.pipeline_mode<synchronous>, transform_indices = @transform_19, window_bounds = array<i64: 16, 16>}, {pipeline_mode = #tpu.pipeline_mode<synchronous>, transform_indices = @transform_20, window_bounds = array<i64: 1, 16>}, {pipeline_mode = #tpu.pipeline_mode<synchronous>, transform_indices = @transform_21, window_bounds = array<i64: 2, 2, 32>}, {pipeline_mode = #tpu.pipeline_mode<synchronous>, transform_indices = @transform_22, window_bounds = array<i64: 2, 16>}]} {
    %c0_i32 = arith.constant 0 : i32
    %0 = arith.cmpi eq, %arg0, %c0_i32 : i32
    %1 = arith.extui %0 : i1 to i32
    %c0_i32_0 = arith.constant 0 : i32
    %2 = arith.cmpi ne, %1, %c0_i32_0 : i32
    scf.if %2 {
      %cst_36 = arith.constant 0.000000e+00 : f32
      %32 = vector.broadcast %cst_36 : f32 to vector<2x32xf32>
      %c0_37 = arith.constant 0 : index
      %c0_38 = arith.constant 0 : index
      %33 = vector.load %arg24[%c0_37, %c0_38] : memref<2x32xf32, #tpu.memory_space<vmem>>, vector<2x32xf32>
      tpu.vector_store %arg24[%c0_37, %c0_38], %32 {strides = array<i32>} : memref<2x32xf32, #tpu.memory_space<vmem>>, vector<2x32xf32>,
      %cst_39 = arith.constant 0.000000e+00 : f32
      %34 = vector.broadcast %cst_39 : f32 to vector<2x32xf32>
      %c0_40 = arith.constant 0 : index
      %c0_41 = arith.constant 0 : index
      %35 = vector.load %arg25[%c0_40, %c0_41] : memref<2x32xf32, #tpu.memory_space<vmem>>, vector<2x32xf32>
      tpu.vector_store %arg25[%c0_40, %c0_41], %34 {strides = array<i32>} : memref<2x32xf32, #tpu.memory_space<vmem>>, vector<2x32xf32>,
      %cst_42 = arith.constant 0.000000e+00 : f32
      %36 = vector.broadcast %cst_42 : f32 to vector<2x32xf32>
      %c0_43 = arith.constant 0 : index
      %c0_44 = arith.constant 0 : index
      %37 = vector.load %arg26[%c0_43, %c0_44] : memref<2x32xf32, #tpu.memory_space<vmem>>, vector<2x32xf32>
      tpu.vector_store %arg26[%c0_43, %c0_44], %36 {strides = array<i32>} : memref<2x32xf32, #tpu.memory_space<vmem>>, vector<2x32xf32>,
      %cst_45 = arith.constant 0.000000e+00 : f32
      %38 = vector.broadcast %cst_45 : f32 to vector<2x32xf32>
      %c0_46 = arith.constant 0 : index
      %c0_47 = arith.constant 0 : index
      %39 = vector.load %arg27[%c0_46, %c0_47] : memref<2x32xf32, #tpu.memory_space<vmem>>, vector<2x32xf32>
      tpu.vector_store %arg27[%c0_46, %c0_47], %38 {strides = array<i32>} : memref<2x32xf32, #tpu.memory_space<vmem>>, vector<2x32xf32>,
    } else {
    }
    %c0 = arith.constant 0 : index
    %c0_1 = arith.constant 0 : index
    %3 = vector.load %arg1[%c0, %c0_1] : memref<2x512xf32, #tpu.memory_space<vmem>>, vector<2x512xf32>
    %c0_2 = arith.constant 0 : index
    %c0_3 = arith.constant 0 : index
    %4 = vector.load %arg4[%c0_2, %c0_3] : memref<512x128xf32, #tpu.memory_space<vmem>>, vector<512x128xf32>
    %cst = arith.constant dense<0.000000e+00> : vector<2x128xf32>
    %5 = tpu.matmul %3, %4, %cst {dimension_numbers = #tpu.dot_dimension_numbers<[1], [0], [0], [1], [0, 0, 1, 1], [], []>} : vector<2x512xf32>, vector<512x128xf32>, vector<2x128xf32> -> vector<2x128xf32>
    %c0_4 = arith.constant 0 : index
    %c0_5 = arith.constant 0 : index
    %6 = vector.load %arg5[%c0_4, %c0_5] : memref<1x128xf32, #tpu.memory_space<vmem>>, vector<1x128xf32>
    %7 = vector.broadcast %6 : vector<1x128xf32> to vector<2x128xf32>
    %8 = arith.addf %5, %7 : vector<2x128xf32>
    %c0_6 = arith.constant 0 : index
    %c0_7 = arith.constant 0 : index
    %9 = vector.load %arg24[%c0_6, %c0_7] : memref<2x32xf32, #tpu.memory_space<vmem>>, vector<2x32xf32>
    %c0_8 = arith.constant 0 : index
    %c0_9 = arith.constant 0 : index
    %10 = vector.load %arg6[%c0_8, %c0_9] : memref<128x32xf32, #tpu.memory_space<vmem>>, vector<128x32xf32>
    %cst_10 = arith.constant dense<0.000000e+00> : vector<2x32xf32>
    %11 = tpu.matmul %8, %10, %cst_10 {dimension_numbers = #tpu.dot_dimension_numbers<[1], [0], [0], [1], [0, 0, 1, 1], [], []>} : vector<2x128xf32>, vector<128x32xf32>, vector<2x32xf32> -> vector<2x32xf32>
    %12 = arith.addf %9, %11 : vector<2x32xf32>
    %c0_11 = arith.constant 0 : index
    %c0_12 = arith.constant 0 : index
    %13 = vector.load %arg24[%c0_11, %c0_12] : memref<2x32xf32, #tpu.memory_space<vmem>>, vector<2x32xf32>
    tpu.vector_store %arg24[%c0_11, %c0_12], %12 {strides = array<i32>} : memref<2x32xf32, #tpu.memory_space<vmem>>, vector<2x32xf32>,
    %c0_13 = arith.constant 0 : index
    %c0_14 = arith.constant 0 : index
    %14 = vector.load %arg25[%c0_13, %c0_14] : memref<2x32xf32, #tpu.memory_space<vmem>>, vector<2x32xf32>
    %c0_15 = arith.constant 0 : index
    %c0_16 = arith.constant 0 : index
    %15 = vector.load %arg7[%c0_15, %c0_16] : memref<128x32xf32, #tpu.memory_space<vmem>>, vector<128x32xf32>
    %cst_17 = arith.constant dense<0.000000e+00> : vector<2x32xf32>
    %16 = tpu.matmul %8, %15, %cst_17 {dimension_numbers = #tpu.dot_dimension_numbers<[1], [0], [0], [1], [0, 0, 1, 1], [], []>} : vector<2x128xf32>, vector<128x32xf32>, vector<2x32xf32> -> vector<2x32xf32>
    %17 = arith.addf %14, %16 : vector<2x32xf32>
    %c0_18 = arith.constant 0 : index
    %c0_19 = arith.constant 0 : index
    %18 = vector.load %arg25[%c0_18, %c0_19] : memref<2x32xf32, #tpu.memory_space<vmem>>, vector<2x32xf32>
    tpu.vector_store %arg25[%c0_18, %c0_19], %17 {strides = array<i32>} : memref<2x32xf32, #tpu.memory_space<vmem>>, vector<2x32xf32>,
    %c0_20 = arith.constant 0 : index
    %c0_21 = arith.constant 0 : index
    %19 = vector.load %arg26[%c0_20, %c0_21] : memref<2x32xf32, #tpu.memory_space<vmem>>, vector<2x32xf32>
    %c0_22 = arith.constant 0 : index
    %c0_23 = arith.constant 0 : index
    %20 = vector.load %arg8[%c0_22, %c0_23] : memref<128x32xf32, #tpu.memory_space<vmem>>, vector<128x32xf32>
    %cst_24 = arith.constant dense<0.000000e+00> : vector<2x32xf32>
    %21 = tpu.matmul %8, %20, %cst_24 {dimension_numbers = #tpu.dot_dimension_numbers<[1], [0], [0], [1], [0, 0, 1, 1], [], []>} : vector<2x128xf32>, vector<128x32xf32>, vector<2x32xf32> -> vector<2x32xf32>
    %22 = arith.addf %19, %21 : vector<2x32xf32>
    %c0_25 = arith.constant 0 : index
    %c0_26 = arith.constant 0 : index
    %23 = vector.load %arg26[%c0_25, %c0_26] : memref<2x32xf32, #tpu.memory_space<vmem>>, vector<2x32xf32>
    tpu.vector_store %arg26[%c0_25, %c0_26], %22 {strides = array<i32>} : memref<2x32xf32, #tpu.memory_space<vmem>>, vector<2x32xf32>,
    %c0_27 = arith.constant 0 : index
    %c0_28 = arith.constant 0 : index
    %24 = vector.load %arg27[%c0_27, %c0_28] : memref<2x32xf32, #tpu.memory_space<vmem>>, vector<2x32xf32>
    %c0_29 = arith.constant 0 : index
    %c0_30 = arith.constant 0 : index
    %25 = vector.load %arg9[%c0_29, %c0_30] : memref<128x32xf32, #tpu.memory_space<vmem>>, vector<128x32xf32>
    %cst_31 = arith.constant dense<0.000000e+00> : vector<2x32xf32>
    %26 = tpu.matmul %8, %25, %cst_31 {dimension_numbers = #tpu.dot_dimension_numbers<[1], [0], [0], [1], [0, 0, 1, 1], [], []>} : vector<2x128xf32>, vector<128x32xf32>, vector<2x32xf32> -> vector<2x32xf32>
    %27 = arith.addf %24, %26 : vector<2x32xf32>
    %c0_32 = arith.constant 0 : index
    %c0_33 = arith.constant 0 : index
    %28 = vector.load %arg27[%c0_32, %c0_33] : memref<2x32xf32, #tpu.memory_space<vmem>>, vector<2x32xf32>
    tpu.vector_store %arg27[%c0_32, %c0_33], %27 {strides = array<i32>} : memref<2x32xf32, #tpu.memory_space<vmem>>, vector<2x32xf32>,
    %c0_i32_34 = arith.constant 0 : i32
    %29 = arith.cmpi eq, %arg0, %c0_i32_34 : i32
    %30 = arith.extui %29 : i1 to i32
    %c0_i32_35 = arith.constant 0 : i32
    %31 = arith.cmpi ne, %30, %c0_i32_35 : i32
    scf.if %31 {
      %c0_36 = arith.constant 0 : index
      %c0_37 = arith.constant 0 : index
      %32 = vector.load %arg2[%c0_36, %c0_37] : memref<2x32xf32, #tpu.memory_space<vmem>>, vector<2x32xf32>
      %c0_38 = arith.constant 0 : index
      %c0_39 = arith.constant 0 : index
      %33 = vector.load %arg3[%c0_38, %c0_39] : memref<2x32xf32, #tpu.memory_space<vmem>>, vector<2x32xf32>
      %c0_40 = arith.constant 0 : index
      %c0_41 = arith.constant 0 : index
      %34 = vector.load %arg24[%c0_40, %c0_41] : memref<2x32xf32, #tpu.memory_space<vmem>>, vector<2x32xf32>
      %c0_42 = arith.constant 0 : index
      %c0_43 = arith.constant 0 : index
      %35 = vector.load %arg10[%c0_42, %c0_43] : memref<32x32xf32, #tpu.memory_space<vmem>>, vector<32x32xf32>
      %cst_44 = arith.constant dense<0.000000e+00> : vector<2x32xf32>
      %36 = tpu.matmul %32, %35, %cst_44 {dimension_numbers = #tpu.dot_dimension_numbers<[1], [0], [0], [1], [0, 0, 1, 1], [], []>} : vector<2x32xf32>, vector<32x32xf32>, vector<2x32xf32> -> vector<2x32xf32>
      %37 = arith.addf %34, %36 : vector<2x32xf32>
      %c0_45 = arith.constant 0 : index
      %c0_46 = arith.constant 0 : index
      %38 = vector.load %arg14[%c0_45, %c0_46] : memref<1x32xf32, #tpu.memory_space<vmem>>, vector<1x32xf32>
      %39 = vector.broadcast %38 : vector<1x32xf32> to vector<2x32xf32>
      %40 = arith.addf %37, %39 : vector<2x32xf32>
      %cst_47 = arith.constant 5.000000e-01 : f32
      %41 = vector.broadcast %cst_47 : f32 to vector<2x32xf32>
      %42 = arith.mulf %41, %40 : vector<2x32xf32>
      %43 = math.tanh %42 : vector<2x32xf32>
      %cst_48 = arith.constant 1.000000e+00 : f32
      %44 = vector.broadcast %cst_48 : f32 to vector<2x32xf32>
      %45 = arith.addf %43, %44 : vector<2x32xf32>
      %cst_49 = arith.constant 5.000000e-01 : f32
      %46 = vector.broadcast %cst_49 : f32 to vector<2x32xf32>
      %47 = arith.mulf %46, %45 : vector<2x32xf32>
      %c0_50 = arith.constant 0 : index
      %c0_51 = arith.constant 0 : index
      %48 = vector.load %arg25[%c0_50, %c0_51] : memref<2x32xf32, #tpu.memory_space<vmem>>, vector<2x32xf32>
      %c0_52 = arith.constant 0 : index
      %c0_53 = arith.constant 0 : index
      %49 = vector.load %arg11[%c0_52, %c0_53] : memref<32x32xf32, #tpu.memory_space<vmem>>, vector<32x32xf32>
      %cst_54 = arith.constant dense<0.000000e+00> : vector<2x32xf32>
      %50 = tpu.matmul %32, %49, %cst_54 {dimension_numbers = #tpu.dot_dimension_numbers<[1], [0], [0], [1], [0, 0, 1, 1], [], []>} : vector<2x32xf32>, vector<32x32xf32>, vector<2x32xf32> -> vector<2x32xf32>
      %51 = arith.addf %48, %50 : vector<2x32xf32>
      %c0_55 = arith.constant 0 : index
      %c0_56 = arith.constant 0 : index
      %52 = vector.load %arg15[%c0_55, %c0_56] : memref<1x32xf32, #tpu.memory_space<vmem>>, vector<1x32xf32>
      %53 = vector.broadcast %52 : vector<1x32xf32> to vector<2x32xf32>
      %54 = arith.addf %51, %53 : vector<2x32xf32>
      %cst_57 = arith.constant 5.000000e-01 : f32
      %55 = vector.broadcast %cst_57 : f32 to vector<2x32xf32>
      %56 = arith.mulf %55, %54 : vector<2x32xf32>
      %57 = math.tanh %56 : vector<2x32xf32>
      %cst_58 = arith.constant 1.000000e+00 : f32
      %58 = vector.broadcast %cst_58 : f32 to vector<2x32xf32>
      %59 = arith.addf %57, %58 : vector<2x32xf32>
      %cst_59 = arith.constant 5.000000e-01 : f32
      %60 = vector.broadcast %cst_59 : f32 to vector<2x32xf32>
      %61 = arith.mulf %60, %59 : vector<2x32xf32>
      %c0_60 = arith.constant 0 : index
      %c0_61 = arith.constant 0 : index
      %62 = vector.load %arg26[%c0_60, %c0_61] : memref<2x32xf32, #tpu.memory_space<vmem>>, vector<2x32xf32>
      %c0_62 = arith.constant 0 : index
      %c0_63 = arith.constant 0 : index
      %63 = vector.load %arg12[%c0_62, %c0_63] : memref<32x32xf32, #tpu.memory_space<vmem>>, vector<32x32xf32>
      %cst_64 = arith.constant dense<0.000000e+00> : vector<2x32xf32>
      %64 = tpu.matmul %32, %63, %cst_64 {dimension_numbers = #tpu.dot_dimension_numbers<[1], [0], [0], [1], [0, 0, 1, 1], [], []>} : vector<2x32xf32>, vector<32x32xf32>, vector<2x32xf32> -> vector<2x32xf32>
      %65 = arith.addf %62, %64 : vector<2x32xf32>
      %c0_65 = arith.constant 0 : index
      %c0_66 = arith.constant 0 : index
      %66 = vector.load %arg16[%c0_65, %c0_66] : memref<1x32xf32, #tpu.memory_space<vmem>>, vector<1x32xf32>
      %67 = vector.broadcast %66 : vector<1x32xf32> to vector<2x32xf32>
      %68 = arith.addf %65, %67 : vector<2x32xf32>
      %69 = math.tanh %68 : vector<2x32xf32>
      %c0_67 = arith.constant 0 : index
      %c0_68 = arith.constant 0 : index
      %70 = vector.load %arg27[%c0_67, %c0_68] : memref<2x32xf32, #tpu.memory_space<vmem>>, vector<2x32xf32>
      %c0_69 = arith.constant 0 : index
      %c0_70 = arith.constant 0 : index
      %71 = vector.load %arg13[%c0_69, %c0_70] : memref<32x32xf32, #tpu.memory_space<vmem>>, vector<32x32xf32>
      %cst_71 = arith.constant dense<0.000000e+00> : vector<2x32xf32>
      %72 = tpu.matmul %32, %71, %cst_71 {dimension_numbers = #tpu.dot_dimension_numbers<[1], [0], [0], [1], [0, 0, 1, 1], [], []>} : vector<2x32xf32>, vector<32x32xf32>, vector<2x32xf32> -> vector<2x32xf32>
      %73 = arith.addf %70, %72 : vector<2x32xf32>
      %c0_72 = arith.constant 0 : index
      %c0_73 = arith.constant 0 : index
      %74 = vector.load %arg17[%c0_72, %c0_73] : memref<1x32xf32, #tpu.memory_space<vmem>>, vector<1x32xf32>
      %75 = vector.broadcast %74 : vector<1x32xf32> to vector<2x32xf32>
      %76 = arith.addf %73, %75 : vector<2x32xf32>
      %cst_74 = arith.constant 5.000000e-01 : f32
      %77 = vector.broadcast %cst_74 : f32 to vector<2x32xf32>
      %78 = arith.mulf %77, %76 : vector<2x32xf32>
      %79 = math.tanh %78 : vector<2x32xf32>
      %cst_75 = arith.constant 1.000000e+00 : f32
      %80 = vector.broadcast %cst_75 : f32 to vector<2x32xf32>
      %81 = arith.addf %79, %80 : vector<2x32xf32>
      %cst_76 = arith.constant 5.000000e-01 : f32
      %82 = vector.broadcast %cst_76 : f32 to vector<2x32xf32>
      %83 = arith.mulf %82, %81 : vector<2x32xf32>
      %84 = arith.mulf %61, %33 : vector<2x32xf32>
      %85 = arith.mulf %47, %69 : vector<2x32xf32>
      %86 = arith.addf %84, %85 : vector<2x32xf32>
      %87 = math.tanh %86 : vector<2x32xf32>
      %88 = arith.mulf %83, %87 : vector<2x32xf32>
      %c0_77 = arith.constant 0 : index
      %c0_78 = arith.constant 0 : index
      %89 = vector.load %arg18[%c0_77, %c0_78] : memref<32x16xf32, #tpu.memory_space<vmem>>, vector<32x16xf32>
      %cst_79 = arith.constant dense<0.000000e+00> : vector<2x16xf32>
      %90 = tpu.matmul %88, %89, %cst_79 {dimension_numbers = #tpu.dot_dimension_numbers<[1], [0], [0], [1], [0, 0, 1, 1], [], []>} : vector<2x32xf32>, vector<32x16xf32>, vector<2x16xf32> -> vector<2x16xf32>
      %c0_80 = arith.constant 0 : index
      %c0_81 = arith.constant 0 : index
      %91 = vector.load %arg19[%c0_80, %c0_81] : memref<1x16xf32, #tpu.memory_space<vmem>>, vector<1x16xf32>
      %92 = vector.broadcast %91 : vector<1x16xf32> to vector<2x16xf32>
      %93 = arith.addf %90, %92 : vector<2x16xf32>
      %cst_82 = arith.constant 0.000000e+00 : f32
      %94 = vector.broadcast %cst_82 : f32 to vector<2x16xf32>
      %95 = arith.maximumf %93, %94 : vector<2x16xf32>
      %c0_83 = arith.constant 0 : index
      %c0_84 = arith.constant 0 : index
      %96 = vector.load %arg20[%c0_83, %c0_84] : memref<16x16xf32, #tpu.memory_space<vmem>>, vector<16x16xf32>
      %cst_85 = arith.constant dense<0.000000e+00> : vector<2x16xf32>
      %97 = tpu.matmul %95, %96, %cst_85 {dimension_numbers = #tpu.dot_dimension_numbers<[1], [0], [0], [1], [0, 0, 1, 1], [], []>} : vector<2x16xf32>, vector<16x16xf32>, vector<2x16xf32> -> vector<2x16xf32>
      %c0_86 = arith.constant 0 : index
      %c0_87 = arith.constant 0 : index
      %98 = vector.load %arg21[%c0_86, %c0_87] : memref<1x16xf32, #tpu.memory_space<vmem>>, vector<1x16xf32>
      %99 = vector.broadcast %98 : vector<1x16xf32> to vector<2x16xf32>
      %100 = arith.addf %97, %99 : vector<2x16xf32>
      %c0_88 = arith.constant 0 : index
      %c0_89 = arith.constant 0 : index
      %101 = vector.load %arg23[%c0_88, %c0_89] : memref<2x16xf32, #tpu.memory_space<vmem>>, vector<2x16xf32>
      tpu.vector_store %arg23[%c0_88, %c0_89], %100 {strides = array<i32>} : memref<2x16xf32, #tpu.memory_space<vmem>>, vector<2x16xf32>,
      %c0_90 = arith.constant 0 : index
      %c0_91 = arith.constant 0 : index
      %c0_92 = arith.constant 0 : index
      %102 = vector.load %arg22[%c0_90, %c0_91, %c0_92] : memref<2x2x32xf32, #tpu.memory_space<vmem>>, vector<1x2x32xf32>
      %103 = vector.shape_cast %102 : vector<1x2x32xf32> to vector<2x32xf32>
      %104 = vector.shape_cast %88 : vector<2x32xf32> to vector<1x2x32xf32>
      tpu.vector_store %arg22[%c0_90, %c0_91, %c0_92], %104 {strides = array<i32>} : memref<2x2x32xf32, #tpu.memory_space<vmem>>, vector<1x2x32xf32>,
      %c1 = arith.constant 1 : index
      %c0_93 = arith.constant 0 : index
      %c0_94 = arith.constant 0 : index
      %105 = vector.load %arg22[%c1, %c0_93, %c0_94] : memref<2x2x32xf32, #tpu.memory_space<vmem>>, vector<1x2x32xf32>
      %106 = vector.shape_cast %105 : vector<1x2x32xf32> to vector<2x32xf32>
      %107 = vector.shape_cast %86 : vector<2x32xf32> to vector<1x2x32xf32>
      tpu.vector_store %arg22[%c1, %c0_93, %c0_94], %107 {strides = array<i32>} : memref<2x2x32xf32, #tpu.memory_space<vmem>>, vector<1x2x32xf32>,
    } else {
    }
    return
  }
  func.func @transform_0(%arg0: i32) -> (i32, i32) {
    %c0_i32 = arith.constant 0 : i32
    %c0_i32_0 = arith.constant 0 : i32
    %c0_i32_1 = arith.constant 0 : i32
    return %c0_i32, %c0_i32_0 : i32, i32
  }
  func.func @transform_1(%arg0: i32) -> (i32, i32) {
    %c0_i32 = arith.constant 0 : i32
    %c0_i32_0 = arith.constant 0 : i32
    %c0_i32_1 = arith.constant 0 : i32
    return %c0_i32, %c0_i32_0 : i32, i32
  }
  func.func @transform_2(%arg0: i32) -> (i32, i32) {
    %c0_i32 = arith.constant 0 : i32
    %c0_i32_0 = arith.constant 0 : i32
    %c0_i32_1 = arith.constant 0 : i32
    return %c0_i32, %c0_i32_0 : i32, i32
  }
  func.func @transform_3(%arg0: i32) -> (i32, i32) {
    %c0_i32 = arith.constant 0 : i32
    %c0_i32_0 = arith.constant 0 : i32
    return %c0_i32, %arg0 : i32, i32
  }
  func.func @transform_4(%arg0: i32) -> (i32, i32) {
    %c0_i32 = arith.constant 0 : i32
    %c0_i32_0 = arith.constant 0 : i32
    return %c0_i32, %arg0 : i32, i32
  }
  func.func @transform_5(%arg0: i32) -> (i32, i32) {
    %c0_i32 = arith.constant 0 : i32
    %c0_i32_0 = arith.constant 0 : i32
    return %arg0, %c0_i32 : i32, i32
  }
  func.func @transform_6(%arg0: i32) -> (i32, i32) {
    %c0_i32 = arith.constant 0 : i32
    %c0_i32_0 = arith.constant 0 : i32
    return %arg0, %c0_i32 : i32, i32
  }
  func.func @transform_7(%arg0: i32) -> (i32, i32) {
    %c0_i32 = arith.constant 0 : i32
    %c0_i32_0 = arith.constant 0 : i32
    return %arg0, %c0_i32 : i32, i32
  }
  func.func @transform_8(%arg0: i32) -> (i32, i32) {
    %c0_i32 = arith.constant 0 : i32
    %c0_i32_0 = arith.constant 0 : i32
    return %arg0, %c0_i32 : i32, i32
  }
  func.func @transform_9(%arg0: i32) -> (i32, i32) {
    %c0_i32 = arith.constant 0 : i32
    %c0_i32_0 = arith.constant 0 : i32
    %c0_i32_1 = arith.constant 0 : i32
    return %c0_i32, %c0_i32_0 : i32, i32
  }
  func.func @transform_10(%arg0: i32) -> (i32, i32) {
    %c0_i32 = arith.constant 0 : i32
    %c0_i32_0 = arith.constant 0 : i32
    %c0_i32_1 = arith.constant 0 : i32
    return %c0_i32, %c0_i32_0 : i32, i32
  }
  func.func @transform_11(%arg0: i32) -> (i32, i32) {
    %c0_i32 = arith.constant 0 : i32
    %c0_i32_0 = arith.constant 0 : i32
    %c0_i32_1 = arith.constant 0 : i32
    return %c0_i32, %c0_i32_0 : i32, i32
  }
  func.func @transform_12(%arg0: i32) -> (i32, i32) {
    %c0_i32 = arith.constant 0 : i32
    %c0_i32_0 = arith.constant 0 : i32
    %c0_i32_1 = arith.constant 0 : i32
    return %c0_i32, %c0_i32_0 : i32, i32
  }
  func.func @transform_13(%arg0: i32) -> (i32, i32) {
    %c0_i32 = arith.constant 0 : i32
    %c0_i32_0 = arith.constant 0 : i32
    %c0_i32_1 = arith.constant 0 : i32
    return %c0_i32, %c0_i32_0 : i32, i32
  }
  func.func @transform_14(%arg0: i32) -> (i32, i32) {
    %c0_i32 = arith.constant 0 : i32
    %c0_i32_0 = arith.constant 0 : i32
    %c0_i32_1 = arith.constant 0 : i32
    return %c0_i32, %c0_i32_0 : i32, i32
  }
  func.func @transform_15(%arg0: i32) -> (i32, i32) {
    %c0_i32 = arith.constant 0 : i32
    %c0_i32_0 = arith.constant 0 : i32
    %c0_i32_1 = arith.constant 0 : i32
    return %c0_i32, %c0_i32_0 : i32, i32
  }
  func.func @transform_16(%arg0: i32) -> (i32, i32) {
    %c0_i32 = arith.constant 0 : i32
    %c0_i32_0 = arith.constant 0 : i32
    %c0_i32_1 = arith.constant 0 : i32
    return %c0_i32, %c0_i32_0 : i32, i32
  }
  func.func @transform_17(%arg0: i32) -> (i32, i32) {
    %c0_i32 = arith.constant 0 : i32
    %c0_i32_0 = arith.constant 0 : i32
    %c0_i32_1 = arith.constant 0 : i32
    return %c0_i32, %c0_i32_0 : i32, i32
  }
  func.func @transform_18(%arg0: i32) -> (i32, i32) {
    %c0_i32 = arith.constant 0 : i32
    %c0_i32_0 = arith.constant 0 : i32
    %c0_i32_1 = arith.constant 0 : i32
    return %c0_i32, %c0_i32_0 : i32, i32
  }
  func.func @transform_19(%arg0: i32) -> (i32, i32) {
    %c0_i32 = arith.constant 0 : i32
    %c0_i32_0 = arith.constant 0 : i32
    %c0_i32_1 = arith.constant 0 : i32
    return %c0_i32, %c0_i32_0 : i32, i32
  }
  func.func @transform_20(%arg0: i32) -> (i32, i32) {
    %c0_i32 = arith.constant 0 : i32
    %c0_i32_0 = arith.constant 0 : i32
    %c0_i32_1 = arith.constant 0 : i32
    return %c0_i32, %c0_i32_0 : i32, i32
  }
  func.func @transform_21(%arg0: i32) -> (i32, i32, i32) {
    %c0_i32 = arith.constant 0 : i32
    %c0_i32_0 = arith.constant 0 : i32
    %c0_i32_1 = arith.constant 0 : i32
    %c0_i32_2 = arith.constant 0 : i32
    return %c0_i32, %c0_i32_0, %c0_i32_1 : i32, i32, i32
  }
  func.func @transform_22(%arg0: i32) -> (i32, i32) {
    %c0_i32 = arith.constant 0 : i32
    %c0_i32_0 = arith.constant 0 : i32
    %c0_i32_1 = arith.constant 0 : i32
    return %c0_i32, %c0_i32_0 : i32, i32
  }
}

</mosaic_0001>

<llo_original>
// kernel: rma_forward.8
$region0: #{rma_forward.8}
  #allocation0 [shape = 'u32[]', space=smem, size = 0x4, offset = 0x4, fixed_abs, tag = 'smem constant byte address 0x4 - core index']
  #allocation1 [shape = 'u32[72,128]{1,0:T(1,128)}', space=vmem, size = 0x9000, scoped, tag = 'internal scratch']
  %s0 = inlined_call_operand.vmem [shape: f32[2,64,32], index: 0, kind: input, shape index: {}]
  %s1 = inlined_call_operand.vmem [shape: f32[2,64,64], index: 1, kind: input, shape index: {}]
  %s2 = inlined_call_operand.vmem [shape: f32[2,16,32], index: 2, kind: output, shape index: {}]
  %s3 = sld [smem:[#allocation0]]
  $region41: #{rma_forward.8} parent=0
    _
  %s5 = ssub.s32 1, %s3
  %s6 = scalar_select 0, %s5, %s3
  loop: start=0, step=1, limit=4
  $region2: #{rma_forward.8} parent=0 // loop_pre_header
    _
  $region3: #{rma_forward.8} parent=0 // loop_header
    %s8 = sphi 0, %s12
    %p9 = scmp.ge.s32.totalorder %s8, 4
    %s18 = sphi 0, %s20
    %s21 = sphi 0, %s18
    %s22 = sphi 0, %s21
    %s38 = sphi 0, %s22
    %s44 = sphi 0, %s46
    %s47 = sphi 0, %s44
    %s48 = sphi 0, %s47
    %s64 = sphi 0, %s48
    %s70 = sphi 0, %s72
    %s73 = sphi 0, %s70
    %s74 = sphi 0, %s73
    %s90 = sphi 0, %s74
  $region4: #{rma_forward.8} parent=0 // loop_header_branch
    %11 = sbr.rel (%p9) target = $region8
  $region5: #{rma_forward.8} parent=0 // loop_body
    %s13 = ssub.s32 %s8, 1
    %s14 = ssub.s32 %s8, 2
    %s15 = sadd.s32 %s8, 1
    %s16 = ssub.s32 %s8, %s15
    %p17 = scmp.eq.s32.totalorder %s16, 0
    %s19 = sadd.s32 %s18, 1
    %s20 = scalar_select %p17, %s18, %s19
    %p23 = pneg %p17
    %p24 = scmp.eq.s32.totalorder %s8, 1
    %p25 = por %p23, %p24
    %p26 = scmp.ne.s32.totalorder %s18, %s21
    %p27 = scmp.eq.s32.totalorder %s8, 0
    %p28 = por %p26, %p27
    %p29 = scmp.ne.s32.totalorder %s18, %s21
    %p30 = scmp.eq.s32.totalorder %s13, 1
    %p31 = por %p29, %p30
    %p32 = scmp.ne.s32.totalorder %s21, %s22
    %p33 = scmp.eq.s32.totalorder %s13, 0
    %p34 = por %p32, %p33
    %p35 = scmp.ne.s32.totalorder %s21, %s22
    %p36 = scmp.eq.s32.totalorder %s14, 1
    %p37 = por %p35, %p36
    %p39 = scmp.ne.s32.totalorder %s22, %s38
    %p40 = scmp.eq.s32.totalorder %s14, 0
    %p41 = por %p39, %p40
    %s42 = ssub.s32 %s8, %s15
    %p43 = scmp.eq.s32.totalorder %s42, 0
    %s45 = sadd.s32 %s44, 1
    %s46 = scalar_select %p43, %s44, %s45
    %p49 = pneg %p43
    %p50 = scmp.eq.s32.totalorder %s8, 1
    %p51 = por %p49, %p50
    %p52 = scmp.ne.s32.totalorder %s44, %s47
    %p53 = scmp.eq.s32.totalorder %s8, 0
    %p54 = por %p52, %p53
    %p55 = scmp.ne.s32.totalorder %s44, %s47
    %p56 = scmp.eq.s32.totalorder %s13, 1
    %p57 = por %p55, %p56
    %p58 = scmp.ne.s32.totalorder %s47, %s48
    %p59 = scmp.eq.s32.totalorder %s13, 0
    %p60 = por %p58, %p59
    %p61 = scmp.ne.s32.totalorder %s47, %s48
    %p62 = scmp.eq.s32.totalorder %s14, 1
    %p63 = por %p61, %p62
    %p65 = scmp.ne.s32.totalorder %s48, %s64
    %p66 = scmp.eq.s32.totalorder %s14, 0
    %p67 = por %p65, %p66
    %s68 = ssub.s32 %s8, %s15
    %p69 = scmp.eq.s32.totalorder %s68, 0
    %s71 = sadd.s32 %s70, 1
    %s72 = scalar_select %p69, %s70, %s71
    %p75 = pneg %p69
    %p76 = scmp.eq.s32.totalorder %s8, 1
    %p77 = por %p75, %p76
    %p78 = scmp.ne.s32.totalorder %s70, %s73
    %p79 = scmp.eq.s32.totalorder %s8, 0
    %p80 = por %p78, %p79
    %p81 = scmp.ne.s32.totalorder %s70, %s73
    %p82 = scmp.eq.s32.totalorder %s13, 1
    %p83 = por %p81, %p82
    %p84 = scmp.ne.s32.totalorder %s73, %s74
    %p85 = scmp.eq.s32.totalorder %s13, 0
    %p86 = por %p84, %p85
    %p87 = scmp.ne.s32.totalorder %s73, %s74
    %p88 = scmp.eq.s32.totalorder %s14, 1
    %p89 = por %p87, %p88
    %p91 = scmp.ne.s32.totalorder %s74, %s90
    %p92 = scmp.eq.s32.totalorder %s14, 0
    %p93 = por %p91, %p92
    %p94 = scmp.le.s32.totalorder 1, %s8
    %p95 = scmp.lt.s32.totalorder %s8, 3
    %p96 = pnand %p94, %p95
    %p97 = pneg %p96
    // Predicated region
    $region9: #{rma_forward.8} parent=5 // pred_check
      _
    $region10: #{rma_forward.8} parent=5 // pred_check_branch
      %99 = sbr.rel (%p96) target = $region12
    $region11: #{rma_forward.8} parent=5 // pred_region
      %s100 = ssub.s32 %s8, 1
    $region12: #{rma_forward.8} parent=5 // pred_fallthru
      _
    %p101 = scmp.lt.s32.totalorder %s8, 2
    // Predicated region
    $region13: #{rma_forward.8} parent=5 // pred_check
      %p102 = pneg %p101
    $region14: #{rma_forward.8} parent=5 // pred_check_branch
      %104 = sbr.rel (%p102) target = $region16
    $region15: #{rma_forward.8} parent=5 // pred_region
      // Predicated region
      $region17: #{rma_forward.8} parent=15 // pred_check
        %p105 = pneg %p28
      $region18: #{rma_forward.8} parent=15 // pred_check_branch
        %107 = sbr.rel (%p105) target = $region20
      $region19: #{rma_forward.8} parent=15 // pred_region
        %p108 = scmp.lt.s32.totalorder %s8, 1
        %s109 = scalar_select %p108, %s8, 1
        %s110 = smul.addr %s109, 8
        %s111 = smul.addr %s110, 8
        %s112 = scalar_lea.vmem %s0, %s111
      $region20: #{rma_forward.8} parent=15 // pred_fallthru
        _
      // Predicated region
      $region21: #{rma_forward.8} parent=15 // pred_check
        %p113 = pneg %p54
      $region22: #{rma_forward.8} parent=15 // pred_check_branch
        %115 = sbr.rel (%p113) target = $region24
      $region23: #{rma_forward.8} parent=15 // pred_region
        %p116 = scmp.lt.s32.totalorder %s8, 1
        %s117 = scalar_select %p116, %s8, 1
        %s118 = smul.addr %s117, 8
        %s119 = smul.addr %s118, 8
        %s120 = scalar_lea.vmem %s1, %s119
      $region24: #{rma_forward.8} parent=15 // pred_fallthru
        _
    $region16: #{rma_forward.8} parent=5 // pred_fallthru
      _
    %p121 = scmp.le.s32.totalorder 1, %s8
    %p122 = scmp.lt.s32.totalorder %s8, 3
    %p123 = pnand %p121, %p122
    %p124 = pneg %p123
    // Predicated region
    $region25: #{rma_forward.8} parent=5 // pred_check
      _
    $region26: #{rma_forward.8} parent=5 // pred_check_branch
      %126 = sbr.rel (%p123) target = $region28
    $region27: #{rma_forward.8} parent=5 // pred_region
      %s127 = ssub.s32 %s8, 1
      %p128 = scmp.lt.s32.totalorder %s13, 1
      %s129 = scalar_select %p128, %s13, 1
      %s130 = smul.addr %s129, 8
      %s131 = smul.addr %s130, 8
      %s132 = scalar_lea.vmem %s0, %s131
      %p133 = pneg %p34
      %p134 = pneg %p31
      %p135 = scmp.lt.s32.totalorder %s13, 1
      %s136 = scalar_select %p135, %s13, 1
      %s137 = smul.addr %s136, 8
      %s138 = smul.addr %s137, 8
      %s139 = scalar_lea.vmem %s1, %s138
      %p140 = pneg %p60
      %p141 = pneg %p57
      %p142 = pneg %p86
      %p143 = pneg %p83
      %p144 = scmp.lt.s32.totalorder %s13, 1
      %s145 = scalar_select %p144, %s13, 1
      %s146 = smul.addr %s145, 2
      %s147 = smul.addr %s146, 8
      %s148 = scalar_lea.vmem %s2, %s147
      %p149 = scmp.lt.s32.totalorder %s13, 1
      %s150 = scalar_select %p149, %s13, 1
      %s151 = smul.addr %s150, 8
      %s152 = smul.addr %s151, 8
      %s153 = scalar_lea.vmem %s0, %s152
      %p154 = scmp.lt.s32.totalorder %s13, 1
      %s155 = scalar_select %p154, %s13, 1
      %s156 = smul.addr %s155, 8
      %s157 = smul.addr %s156, 8
      %s158 = scalar_lea.vmem %s1, %s157
      %p159 = scmp.lt.s32.totalorder %s13, 1
      %s160 = scalar_select %p159, %s13, 1
      %s161 = smul.addr %s160, 2
      %s162 = smul.addr %s161, 8
      %s163 = scalar_lea.vmem %s2, %s162
      %v164 = vld [vmem:[%s158] sm:$0xff]
      %v165 = vld [vmem:[%s158 + $0x8] sm:$0xff]
      %v166 = vld [vmem:[%s158 + $0x10] sm:$0xff]
      %v167 = vld [vmem:[%s158 + $0x18] sm:$0xff]
      %v168 = vld [vmem:[%s158 + $0x20] sm:$0xff]
      %v169 = vld [vmem:[%s158 + $0x28] sm:$0xff]
      %v170 = vld [vmem:[%s158 + $0x30] sm:$0xff]
      %v171 = vld [vmem:[%s158 + $0x38] sm:$0xff]
      %v172 = vld [vmem:[%s153] sm:$0xff]
      %v173 = vld [vmem:[%s153 + $0x8] sm:$0xff]
      %v174 = vld [vmem:[%s153 + $0x10] sm:$0xff]
      %v175 = vld [vmem:[%s153 + $0x18] sm:$0xff]
      %v176 = vld [vmem:[%s153 + $0x20] sm:$0xff]
      %v177 = vld [vmem:[%s153 + $0x28] sm:$0xff]
      %v178 = vld [vmem:[%s153 + $0x30] sm:$0xff]
      %v179 = vld [vmem:[%s153 + $0x38] sm:$0xff]
      %vm180 = vcmask 523264
      %v182 = vsel %vm180, %v164, 0
      %v185 = vsel %vm180, %v165, 0
      %v188 = vsel %vm180, %v166, 0
      %v191 = vsel %vm180, %v167, 0
      %v194 = vsel %vm180, %v168, 0
      %v197 = vsel %vm180, %v169, 0
      %v200 = vsel %vm180, %v170, 0
      %v203 = vsel %vm180, %v171, 0
      %205 = vmatpush.msra.mxu0 0.0
      %206 = vmatpush.msra.mxu0 0.0
      %207 = vmatpush.msra.mxu0 0.0
      %208 = vmatpush.msra.mxu0 0.0
      %209 = vmatpush.msra.mxu0 0.0
      %210 = vmatpush.msra.mxu0 0.0
      %211 = vmatpush.msra.mxu0 0.0
      %212 = vmatpush.msra.mxu0 0.0
      %213 = vmatpush.msra.mxu0 %v179
      %214 = vmatpush.msra.mxu0 %v178
      %215 = vmatpush.msra.mxu0 %v177
      %216 = vmatpush.msra.mxu0 %v176
      %217 = vmatpush.msra.mxu0 %v175
      %218 = vmatpush.msra.mxu0 %v174
      %219 = vmatpush.msra.mxu0 %v173
      %220 = vmatpush.msra.mxu0 %v172
      %221 = vmatmul.f32.gmra.mxu0 %v182
      %v222 = vpop.f32.mrf.mxu0
      %v223 = vadd.f32 0.0, %v222
      %224 = vmatmul.f32.gmra.mxu0 %v185
      %v225 = vpop.f32.mrf.mxu0
      %v226 = vadd.f32 0.0, %v225
      %227 = vmatmul.f32.gmra.mxu0 %v188
      %v228 = vpop.f32.mrf.mxu0
      %v229 = vadd.f32 0.0, %v228
      %230 = vmatmul.f32.gmra.mxu0 %v191
      %v231 = vpop.f32.mrf.mxu0
      %v232 = vadd.f32 0.0, %v231
      %233 = vmatmul.f32.gmra.mxu0 %v194
      %v234 = vpop.f32.mrf.mxu0
      %v235 = vadd.f32 0.0, %v234
      %236 = vmatmul.f32.gmra.mxu0 %v197
      %v237 = vpop.f32.mrf.mxu0
      %v238 = vadd.f32 0.0, %v237
      %239 = vmatmul.f32.gmra.mxu0 %v200
      %v240 = vpop.f32.mrf.mxu0
      %v241 = vadd.f32 0.0, %v240
      %242 = vmatmul.f32.gmra.mxu0 %v203
      %v243 = vpop.f32.mrf.mxu0
      %v244 = vadd.f32 0.0, %v243
      %245 = vdwg.mxu0
      %v246 = vmax.f32 %v223, %v229
      %v247 = vmax.f32 %v226, %v232
      %v248 = vmax.f32 %v235, %v241
      %v249 = vmax.f32 %v238, %v244
      %v250 = vmax.f32 %v246, %v248
      %v251 = vmax.f32 %v247, %v249
      %vm252 = vcmask 261120
      %253 = vst.msk [vmem:[%s163] sm:$0xff] %vm252, %v250
      %254 = vst.msk [vmem:[%s163 + $0x8] sm:$0xff] %vm252, %v251
      %p255 = scmp.lt.s32.totalorder %s13, 1
      %s256 = scalar_select %p255, %s13, 1
      %s257 = smul.addr %s256, 2
      %s258 = smul.addr %s257, 8
      %s259 = scalar_lea.vmem %s2, %s258
      // Predicated region
      $region29: #{rma_forward.8} parent=27 // pred_check
        %p260 = pneg %p83
      $region30: #{rma_forward.8} parent=27 // pred_check_branch
        %262 = sbr.rel (%p260) target = $region32
      $region31: #{rma_forward.8} parent=27 // pred_region
        _
      $region32: #{rma_forward.8} parent=27 // pred_fallthru
        _
    $region28: #{rma_forward.8} parent=5 // pred_fallthru
      _
    %p263 = scmp.le.s32.totalorder 2, %s8
    // Predicated region
    $region33: #{rma_forward.8} parent=5 // pred_check
      %p264 = pneg %p263
    $region34: #{rma_forward.8} parent=5 // pred_check_branch
      %266 = sbr.rel (%p264) target = $region36
    $region35: #{rma_forward.8} parent=5 // pred_region
      %s267 = ssub.s32 %s8, 2
      // Predicated region
      $region37: #{rma_forward.8} parent=35 // pred_check
        %p268 = pneg %p89
      $region38: #{rma_forward.8} parent=35 // pred_check_branch
        %270 = sbr.rel (%p268) target = $region40
      $region39: #{rma_forward.8} parent=35 // pred_region
        %p271 = scmp.lt.s32.totalorder %s14, 1
        %s272 = scalar_select %p271, %s14, 1
        %s273 = smul.addr %s272, 2
        %s274 = smul.addr %s273, 8
        %s275 = scalar_lea.vmem %s2, %s274
      $region40: #{rma_forward.8} parent=35 // pred_fallthru
        _
    $region36: #{rma_forward.8} parent=5 // pred_fallthru
      _
  $region6: #{rma_forward.8} parent=0 // loop_footer
    %s12 = sadd.s32 1, %s8
  $region7: #{rma_forward.8} parent=0 // loop_footer_branch
    %7 = sbr.rel target = $region3
  $region8: #{rma_forward.8} parent=0 // loop_exit
    _

// kernel: rma_forward.9
$region0: #{rma_forward.9}
  #allocation0 [shape = 'u32[]', space=smem, size = 0x4, offset = 0x4, fixed_abs, tag = 'smem constant byte address 0x4 - core index']
  #allocation1 [shape = 'u32[72,128]{1,0:T(1,128)}', space=vmem, size = 0x9000, scoped, tag = 'internal scratch']
  #allocation2 [shape = 'f32[2,32]{1,0:T(2,128)}', space=vmem, size = 0x400, scoped, tag = 'scratch operand']
  #allocation3 [shape = 'f32[2,32]{1,0:T(2,128)}', space=vmem, size = 0x400, scoped, tag = 'scratch operand']
  #allocation4 [shape = 'f32[2,32]{1,0:T(2,128)}', space=vmem, size = 0x400, scoped, tag = 'scratch operand']
  #allocation5 [shape = 'f32[2,32]{1,0:T(2,128)}', space=vmem, size = 0x400, scoped, tag = 'scratch operand']
  %s0 = inlined_call_operand.vmem [shape: f32[2,512], index: 0, kind: input, shape index: {}]
  %s1 = inlined_call_operand.vmem [shape: f32[2,32], index: 1, kind: input, shape index: {}, may-alias: {1,2}]
  %s2 = inlined_call_operand.vmem [shape: f32[2,32], index: 2, kind: input, shape index: {}, may-alias: {1,2}]
  %s3 = inlined_call_operand.vmem [shape: f32[512,128], index: 3, kind: input, shape index: {}]
  %s4 = inlined_call_operand.vmem [shape: f32[1,128], index: 4, kind: input, shape index: {}]
  %s5 = inlined_call_operand.vmem [shape: f32[128,32], index: 5, kind: input, shape index: {}]
  %s6 = inlined_call_operand.vmem [shape: f32[128,32], index: 6, kind: input, shape index: {}]
  %s7 = inlined_call_operand.vmem [shape: f32[128,32], index: 7, kind: input, shape index: {}]
  %s8 = inlined_call_operand.vmem [shape: f32[128,32], index: 8, kind: input, shape index: {}]
  %s9 = inlined_call_operand.vmem [shape: f32[32,32], index: 9, kind: input, shape index: {}]
  %s10 = inlined_call_operand.vmem [shape: f32[32,32], index: 10, kind: input, shape index: {}]
  %s11 = inlined_call_operand.vmem [shape: f32[32,32], index: 11, kind: input, shape index: {}]
  %s12 = inlined_call_operand.vmem [shape: f32[32,32], index: 12, kind: input, shape index: {}]
  %s13 = inlined_call_operand.vmem [shape: f32[1,32], index: 13, kind: input, shape index: {}]
  %s14 = inlined_call_operand.vmem [shape: f32[1,32], index: 14, kind: input, shape index: {}]
  %s15 = inlined_call_operand.vmem [shape: f32[1,32], index: 15, kind: input, shape index: {}]
  %s16 = inlined_call_operand.vmem [shape: f32[1,32], index: 16, kind: input, shape index: {}]
  %s17 = inlined_call_operand.vmem [shape: f32[32,16], index: 17, kind: input, shape index: {}]
  %s18 = inlined_call_operand.vmem [shape: f32[1,16], index: 18, kind: input, shape index: {}]
  %s19 = inlined_call_operand.vmem [shape: f32[16,16], index: 19, kind: input, shape index: {}]
  %s20 = inlined_call_operand.vmem [shape: f32[1,16], index: 20, kind: input, shape index: {}]
  %s21 = inlined_call_operand.vmem [shape: f32[2,2,32], index: 21, kind: output, shape index: {0}]
  %s22 = inlined_call_operand.vmem [shape: f32[2,16], index: 22, kind: output, shape index: {1}]
  %23 = xla_tuple %s21, %s22
  %s24 = sld [smem:[#allocation0]]
  $region110: #{rma_forward.9} parent=0
    _
  %s26 = ssub.s32 1, %s24
  %s27 = scalar_select 0, %s26, %s24
  // Predicated region
  $region2: #{rma_forward.9} parent=0 // pred_check
    _
  $region3: #{rma_forward.9} parent=0 // pred_check_branch
    %29 = sbr.rel (0) target = $region5
  $region4: #{rma_forward.9} parent=0 // pred_region
    _
  $region5: #{rma_forward.9} parent=0 // pred_fallthru
    _
  // Predicated region
  $region6: #{rma_forward.9} parent=0 // pred_check
    _
  $region7: #{rma_forward.9} parent=0 // pred_check_branch
    %31 = sbr.rel (0) target = $region9
  $region8: #{rma_forward.9} parent=0 // pred_region
    _
  $region9: #{rma_forward.9} parent=0 // pred_fallthru
    _
  // Predicated region
  $region10: #{rma_forward.9} parent=0 // pred_check
    _
  $region11: #{rma_forward.9} parent=0 // pred_check_branch
    %33 = sbr.rel (0) target = $region13
  $region12: #{rma_forward.9} parent=0 // pred_region
    _
  $region13: #{rma_forward.9} parent=0 // pred_fallthru
    _
  // Predicated region
  $region14: #{rma_forward.9} parent=0 // pred_check
    _
  $region15: #{rma_forward.9} parent=0 // pred_check_branch
    %35 = sbr.rel (0) target = $region17
  $region16: #{rma_forward.9} parent=0 // pred_region
    _
  $region17: #{rma_forward.9} parent=0 // pred_fallthru
    _
  // Predicated region
  $region18: #{rma_forward.9} parent=0 // pred_check
    _
  $region19: #{rma_forward.9} parent=0 // pred_check_branch
    %37 = sbr.rel (0) target = $region21
  $region20: #{rma_forward.9} parent=0 // pred_region
    _
  $region21: #{rma_forward.9} parent=0 // pred_fallthru
    _
  // Predicated region
  $region22: #{rma_forward.9} parent=0 // pred_check
    _
  $region23: #{rma_forward.9} parent=0 // pred_check_branch
    %39 = sbr.rel (0) target = $region25
  $region24: #{rma_forward.9} parent=0 // pred_region
    _
  $region25: #{rma_forward.9} parent=0 // pred_fallthru
    _
  // Predicated region
  $region26: #{rma_forward.9} parent=0 // pred_check
    _
  $region27: #{rma_forward.9} parent=0 // pred_check_branch
    %41 = sbr.rel (0) target = $region29
  $region28: #{rma_forward.9} parent=0 // pred_region
    _
  $region29: #{rma_forward.9} parent=0 // pred_fallthru
    _
  // Predicated region
  $region30: #{rma_forward.9} parent=0 // pred_check
    _
  $region31: #{rma_forward.9} parent=0 // pred_check_branch
    %43 = sbr.rel (0) target = $region33
  $region32: #{rma_forward.9} parent=0 // pred_region
    _
  $region33: #{rma_forward.9} parent=0 // pred_fallthru
    _
  // Predicated region
  $region34: #{rma_forward.9} parent=0 // pred_check
    _
  $region35: #{rma_forward.9} parent=0 // pred_check_branch
    %45 = sbr.rel (0) target = $region37
  $region36: #{rma_forward.9} parent=0 // pred_region
    _
  $region37: #{rma_forward.9} parent=0 // pred_fallthru
    _
  // Predicated region
  $region38: #{rma_forward.9} parent=0 // pred_check
    _
  $region39: #{rma_forward.9} parent=0 // pred_check_branch
    %47 = sbr.rel (0) target = $region41
  $region40: #{rma_forward.9} parent=0 // pred_region
    _
  $region41: #{rma_forward.9} parent=0 // pred_fallthru
    _
  // Predicated region
  $region42: #{rma_forward.9} parent=0 // pred_check
    _
  $region43: #{rma_forward.9} parent=0 // pred_check_branch
    %49 = sbr.rel (0) target = $region45
  $region44: #{rma_forward.9} parent=0 // pred_region
    _
  $region45: #{rma_forward.9} parent=0 // pred_fallthru
    _
  // Predicated region
  $region46: #{rma_forward.9} parent=0 // pred_check
    _
  $region47: #{rma_forward.9} parent=0 // pred_check_branch
    %51 = sbr.rel (0) target = $region49
  $region48: #{rma_forward.9} parent=0 // pred_region
    _
  $region49: #{rma_forward.9} parent=0 // pred_fallthru
    _
  // Predicated region
  $region50: #{rma_forward.9} parent=0 // pred_check
    _
  $region51: #{rma_forward.9} parent=0 // pred_check_branch
    %53 = sbr.rel (0) target = $region53
  $region52: #{rma_forward.9} parent=0 // pred_region
    _
  $region53: #{rma_forward.9} parent=0 // pred_fallthru
    _
  // Predicated region
  $region54: #{rma_forward.9} parent=0 // pred_check
    _
  $region55: #{rma_forward.9} parent=0 // pred_check_branch
    %55 = sbr.rel (0) target = $region57
  $region56: #{rma_forward.9} parent=0 // pred_region
    _
  $region57: #{rma_forward.9} parent=0 // pred_fallthru
    _
  // Predicated region
  $region58: #{rma_forward.9} parent=0 // pred_check
    _
  $region59: #{rma_forward.9} parent=0 // pred_check_branch
    %57 = sbr.rel (0) target = $region61
  $region60: #{rma_forward.9} parent=0 // pred_region
    _
  $region61: #{rma_forward.9} parent=0 // pred_fallthru
    _
  // Predicated region
  $region62: #{rma_forward.9} parent=0 // pred_check
    _
  $region63: #{rma_forward.9} parent=0 // pred_check_branch
    %59 = sbr.rel (0) target = $region65
  $region64: #{rma_forward.9} parent=0 // pred_region
    _
  $region65: #{rma_forward.9} parent=0 // pred_fallthru
    _
  // Predicated region
  $region66: #{rma_forward.9} parent=0 // pred_check
    _
  $region67: #{rma_forward.9} parent=0 // pred_check_branch
    %61 = sbr.rel (0) target = $region69
  $region68: #{rma_forward.9} parent=0 // pred_region
    _
  $region69: #{rma_forward.9} parent=0 // pred_fallthru
    _
  // Predicated region
  $region70: #{rma_forward.9} parent=0 // pred_check
    _
  $region71: #{rma_forward.9} parent=0 // pred_check_branch
    %63 = sbr.rel (0) target = $region73
  $region72: #{rma_forward.9} parent=0 // pred_region
    _
  $region73: #{rma_forward.9} parent=0 // pred_fallthru
    _
  // Predicated region
  $region74: #{rma_forward.9} parent=0 // pred_check
    _
  $region75: #{rma_forward.9} parent=0 // pred_check_branch
    %65 = sbr.rel (0) target = $region77
  $region76: #{rma_forward.9} parent=0 // pred_region
    _
  $region77: #{rma_forward.9} parent=0 // pred_fallthru
    _
  // Predicated region
  $region78: #{rma_forward.9} parent=0 // pred_check
    _
  $region79: #{rma_forward.9} parent=0 // pred_check_branch
    %67 = sbr.rel (0) target = $region81
  $region80: #{rma_forward.9} parent=0 // pred_region
    _
  $region81: #{rma_forward.9} parent=0 // pred_fallthru
    _
  // Predicated region
  $region82: #{rma_forward.9} parent=0 // pred_check
    _
  $region83: #{rma_forward.9} parent=0 // pred_check_branch
    %69 = sbr.rel (0) target = $region85
  $region84: #{rma_forward.9} parent=0 // pred_region
    _
  $region85: #{rma_forward.9} parent=0 // pred_fallthru
    _
  %p70 = scmp.eq.s32.totalorder 0, 0
  // Predicated region
  $region86: #{rma_forward.9} parent=0 // pred_check
    %p71 = pneg %p70
  $region87: #{rma_forward.9} parent=0 // pred_check_branch
    %73 = sbr.rel (%p71) target = $region89
  $region88: #{rma_forward.9} parent=0 // pred_region
    %vm74 = vcmask 254976
    %75 = vst.msk [vmem:[#allocation2] sm:$0x3] %vm74, 0.0
    %76 = vst.msk [vmem:[#allocation3] sm:$0x3] %vm74, 0.0
    %77 = vst.msk [vmem:[#allocation4] sm:$0x3] %vm74, 0.0
    %78 = vst.msk [vmem:[#allocation5] sm:$0x3] %vm74, 0.0
  $region89: #{rma_forward.9} parent=0 // pred_fallthru
    _
  %v79 = vld [vmem:[%s0] sm:$0xff]
  %v80 = vld [vmem:[%s3] sm:$0xff]
  %v81 = vld [vmem:[%s3 + $0x8] sm:$0xff]
  %v82 = vld [vmem:[%s3 + $0x10] sm:$0xff]
  %v83 = vld [vmem:[%s3 + $0x18] sm:$0xff]
  %v84 = vld [vmem:[%s3 + $0x20] sm:$0xff]
  %v85 = vld [vmem:[%s3 + $0x28] sm:$0xff]
  %v86 = vld [vmem:[%s3 + $0x30] sm:$0xff]
  %v87 = vld [vmem:[%s3 + $0x38] sm:$0xff]
  %v88 = vld [vmem:[%s3 + $0x40] sm:$0xff]
  %v89 = vld [vmem:[%s3 + $0x48] sm:$0xff]
  %v90 = vld [vmem:[%s3 + $0x50] sm:$0xff]
  %v91 = vld [vmem:[%s3 + $0x58] sm:$0xff]
  %v92 = vld [vmem:[%s3 + $0x60] sm:$0xff]
  %v93 = vld [vmem:[%s3 + $0x68] sm:$0xff]
  %v94 = vld [vmem:[%s3 + $0x70] sm:$0xff]
  %v95 = vld [vmem:[%s3 + $0x78] sm:$0xff]
  %v96 = vld [vmem:[%s3 + $0x80] sm:$0xff]
  %v97 = vld [vmem:[%s3 + $0x88] sm:$0xff]
  %v98 = vld [vmem:[%s3 + $0x90] sm:$0xff]
  %v99 = vld [vmem:[%s3 + $0x98] sm:$0xff]
  %v100 = vld [vmem:[%s3 + $0xa0] sm:$0xff]
  %v101 = vld [vmem:[%s3 + $0xa8] sm:$0xff]
  %v102 = vld [vmem:[%s3 + $0xb0] sm:$0xff]
  %v103 = vld [vmem:[%s3 + $0xb8] sm:$0xff]
  %v104 = vld [vmem:[%s3 + $0xc0] sm:$0xff]
  %v105 = vld [vmem:[%s3 + $0xc8] sm:$0xff]
  %v106 = vld [vmem:[%s3 + $0xd0] sm:$0xff]
  %v107 = vld [vmem:[%s3 + $0xd8] sm:$0xff]
  %v108 = vld [vmem:[%s3 + $0xe0] sm:$0xff]
  %v109 = vld [vmem:[%s3 + $0xe8] sm:$0xff]
  %v110 = vld [vmem:[%s3 + $0xf0] sm:$0xff]
  %v111 = vld [vmem:[%s3 + $0xf8] sm:$0xff]
  %v112 = vld [vmem:[%s3 + $0x100] sm:$0xff]
  %v113 = vld [vmem:[%s3 + $0x108] sm:$0xff]
  %v114 = vld [vmem:[%s3 + $0x110] sm:$0xff]
  %v115 = vld [vmem:[%s3 + $0x118] sm:$0xff]
  %v116 = vld [vmem:[%s3 + $0x120] sm:$0xff]
  %v117 = vld [vmem:[%s3 + $0x128] sm:$0xff]
  %v118 = vld [vmem:[%s3 + $0x130] sm:$0xff]
  %v119 = vld [vmem:[%s3 + $0x138] sm:$0xff]
  %v120 = vld [vmem:[%s3 + $0x140] sm:$0xff]
  %v121 = vld [vmem:[%s3 + $0x148] sm:$0xff]
  %v122 = vld [vmem:[%s3 + $0x150] sm:$0xff]
  %v123 = vld [vmem:[%s3 + $0x158] sm:$0xff]
  %v124 = vld [vmem:[%s3 + $0x160] sm:$0xff]
  %v125 = vld [vmem:[%s3 + $0x168] sm:$0xff]
  %v126 = vld [vmem:[%s3 + $0x170] sm:$0xff]
  %v127 = vld [vmem:[%s3 + $0x178] sm:$0xff]
  %v128 = vld [vmem:[%s3 + $0x180] sm:$0xff]
  %v129 = vld [vmem:[%s3 + $0x188] sm:$0xff]
  %v130 = vld [vmem:[%s3 + $0x190] sm:$0xff]
  %v131 = vld [vmem:[%s3 + $0x198] sm:$0xff]
  %v132 = vld [vmem:[%s3 + $0x1a0] sm:$0xff]
  %v133 = vld [vmem:[%s3 + $0x1a8] sm:$0xff]
  %v134 = vld [vmem:[%s3 + $0x1b0] sm:$0xff]
  %v135 = vld [vmem:[%s3 + $0x1b8] sm:$0xff]
  %v136 = vld [vmem:[%s3 + $0x1c0] sm:$0xff]
  %v137 = vld [vmem:[%s3 + $0x1c8] sm:$0xff]
  %v138 = vld [vmem:[%s3 + $0x1d0] sm:$0xff]
  %v139 = vld [vmem:[%s3 + $0x1d8] sm:$0xff]
  %v140 = vld [vmem:[%s3 + $0x1e0] sm:$0xff]
  %v141 = vld [vmem:[%s3 + $0x1e8] sm:$0xff]
  %v142 = vld [vmem:[%s3 + $0x1f0] sm:$0xff]
  %v143 = vld [vmem:[%s3 + $0x1f8] sm:$0xff]
  %v144 = vld [vmem:[%s4] sm:$0x1]
  %v146 = vperm.slane %v144, 0
  %149 = vst [vmem:[#allocation1] ss:$4 sm:$0xff] %v79
  %v150 = vld.sshfl [vmem:[#allocation1] sm:$0xff pattern:$0x73625140]
  %v151 = vld.sshfl [vmem:[#allocation1 + $0x8] sm:$0xff pattern:$0x73625140]
  %v152 = vld.sshfl [vmem:[#allocation1 + $0x10] sm:$0xff pattern:$0x73625140]
  %v153 = vld.sshfl [vmem:[#allocation1 + $0x18] sm:$0xff pattern:$0x73625140]
  %158 = vmatpush.msra.mxu0 %v95
  %159 = vmatpush.msra.mxu0 %v94
  %160 = vmatpush.msra.mxu0 %v93
  %161 = vmatpush.msra.mxu0 %v92
  %162 = vmatpush.msra.mxu0 %v91
  %163 = vmatpush.msra.mxu0 %v90
  %164 = vmatpush.msra.mxu0 %v89
  %165 = vmatpush.msra.mxu0 %v88
  %166 = vmatpush.msra.mxu0 %v87
  %167 = vmatpush.msra.mxu0 %v86
  %168 = vmatpush.msra.mxu0 %v85
  %169 = vmatpush.msra.mxu0 %v84
  %170 = vmatpush.msra.mxu0 %v83
  %171 = vmatpush.msra.mxu0 %v82
  %172 = vmatpush.msra.mxu0 %v81
  %173 = vmatpush.msra.mxu0 %v80
  %174 = vmatmul.f32.gmra.mxu0 %v150
  %v175 = vpop.f32.mrf.mxu0
  %v176 = vadd.f32 %v146, %v175
  %177 = vdwg.mxu0
  %178 = vmatpush.msra.mxu0 %v111
  %179 = vmatpush.msra.mxu0 %v110
  %180 = vmatpush.msra.mxu0 %v109
  %181 = vmatpush.msra.mxu0 %v108
  %182 = vmatpush.msra.mxu0 %v107
  %183 = vmatpush.msra.mxu0 %v106
  %184 = vmatpush.msra.mxu0 %v105
  %185 = vmatpush.msra.mxu0 %v104
  %186 = vmatpush.msra.mxu0 %v103
  %187 = vmatpush.msra.mxu0 %v102
  %188 = vmatpush.msra.mxu0 %v101
  %189 = vmatpush.msra.mxu0 %v100
  %190 = vmatpush.msra.mxu0 %v99
  %191 = vmatpush.msra.mxu0 %v98
  %192 = vmatpush.msra.mxu0 %v97
  %193 = vmatpush.msra.mxu0 %v96
  %194 = vmatmul.f32.gmra.mxu0 %v151
  %v195 = vpop.f32.mrf.mxu0
  %v196 = vadd.f32 %v176, %v195
  %197 = vdwg.mxu0
  %198 = vmatpush.msra.mxu0 %v127
  %199 = vmatpush.msra.mxu0 %v126
  %200 = vmatpush.msra.mxu0 %v125
  %201 = vmatpush.msra.mxu0 %v124
  %202 = vmatpush.msra.mxu0 %v123
  %203 = vmatpush.msra.mxu0 %v122
  %204 = vmatpush.msra.mxu0 %v121
  %205 = vmatpush.msra.mxu0 %v120
  %206 = vmatpush.msra.mxu0 %v119
  %207 = vmatpush.msra.mxu0 %v118
  %208 = vmatpush.msra.mxu0 %v117
  %209 = vmatpush.msra.mxu0 %v116
  %210 = vmatpush.msra.mxu0 %v115
  %211 = vmatpush.msra.mxu0 %v114
  %212 = vmatpush.msra.mxu0 %v113
  %213 = vmatpush.msra.mxu0 %v112
  %214 = vmatmul.f32.gmra.mxu0 %v152
  %v215 = vpop.f32.mrf.mxu0
  %v216 = vadd.f32 %v196, %v215
  %217 = vdwg.mxu0
  %218 = vmatpush.msra.mxu0 %v143
  %219 = vmatpush.msra.mxu0 %v142
  %220 = vmatpush.msra.mxu0 %v141
  %221 = vmatpush.msra.mxu0 %v140
  %222 = vmatpush.msra.mxu0 %v139
  %223 = vmatpush.msra.mxu0 %v138
  %224 = vmatpush.msra.mxu0 %v137
  %225 = vmatpush.msra.mxu0 %v136
  %226 = vmatpush.msra.mxu0 %v135
  %227 = vmatpush.msra.mxu0 %v134
  %228 = vmatpush.msra.mxu0 %v133
  %229 = vmatpush.msra.mxu0 %v132
  %230 = vmatpush.msra.mxu0 %v131
  %231 = vmatpush.msra.mxu0 %v130
  %232 = vmatpush.msra.mxu0 %v129
  %233 = vmatpush.msra.mxu0 %v128
  %234 = vmatmul.f32.gmra.mxu0 %v153
  %v235 = vpop.f32.mrf.mxu0
  %v236 = vadd.f32 %v216, %v235
  %237 = vdwg.mxu0
  %v238 = vld [vmem:[#allocation2] sm:$0x3]
  %v239 = vld [vmem:[%s5] sm:$0xff]
  %v240 = vld [vmem:[%s5 + $0x8] sm:$0xff]
  %v241 = vld [vmem:[%s5 + $0x10] sm:$0xff]
  %v242 = vld [vmem:[%s5 + $0x18] sm:$0xff]
  %v243 = vld [vmem:[%s5 + $0x20] sm:$0xff]
  %v244 = vld [vmem:[%s5 + $0x28] sm:$0xff]
  %v245 = vld [vmem:[%s5 + $0x30] sm:$0xff]
  %v246 = vld [vmem:[%s5 + $0x38] sm:$0xff]
  %v247 = vld [vmem:[%s5 + $0x40] sm:$0xff]
  %v248 = vld [vmem:[%s5 + $0x48] sm:$0xff]
  %v249 = vld [vmem:[%s5 + $0x50] sm:$0xff]
  %v250 = vld [vmem:[%s5 + $0x58] sm:$0xff]
  %v251 = vld [vmem:[%s5 + $0x60] sm:$0xff]
  %v252 = vld [vmem:[%s5 + $0x68] sm:$0xff]
  %v253 = vld [vmem:[%s5 + $0x70] sm:$0xff]
  %v254 = vld [vmem:[%s5 + $0x78] sm:$0xff]
  %255 = vmatpush.msra.mxu0 %v254
  %256 = vmatpush.msra.mxu0 %v253
  %257 = vmatpush.msra.mxu0 %v252
  %258 = vmatpush.msra.mxu0 %v251
  %259 = vmatpush.msra.mxu0 %v250
  %260 = vmatpush.msra.mxu0 %v249
  %261 = vmatpush.msra.mxu0 %v248
  %262 = vmatpush.msra.mxu0 %v247
  %263 = vmatpush.msra.mxu0 %v246
  %264 = vmatpush.msra.mxu0 %v245
  %265 = vmatpush.msra.mxu0 %v244
  %266 = vmatpush.msra.mxu0 %v243
  %267 = vmatpush.msra.mxu0 %v242
  %268 = vmatpush.msra.mxu0 %v241
  %269 = vmatpush.msra.mxu0 %v240
  %270 = vmatpush.msra.mxu0 %v239
  %271 = vmatmul.f32.gmra.mxu0 %v236
  %v272 = vpop.f32.mrf.mxu0
  %v273 = vadd.f32 0.0, %v272
  %274 = vdwg.mxu0
  %v275 = vadd.f32 %v238, %v273
  %vm276 = vcmask 254976
  %277 = vst.msk [vmem:[#allocation2] sm:$0x3] %vm276, %v275
  %v278 = vld [vmem:[#allocation3] sm:$0x3]
  %v279 = vld [vmem:[%s6] sm:$0xff]
  %v280 = vld [vmem:[%s6 + $0x8] sm:$0xff]
  %v281 = vld [vmem:[%s6 + $0x10] sm:$0xff]
  %v282 = vld [vmem:[%s6 + $0x18] sm:$0xff]
  %v283 = vld [vmem:[%s6 + $0x20] sm:$0xff]
  %v284 = vld [vmem:[%s6 + $0x28] sm:$0xff]
  %v285 = vld [vmem:[%s6 + $0x30] sm:$0xff]
  %v286 = vld [vmem:[%s6 + $0x38] sm:$0xff]
  %v287 = vld [vmem:[%s6 + $0x40] sm:$0xff]
  %v288 = vld [vmem:[%s6 + $0x48] sm:$0xff]
  %v289 = vld [vmem:[%s6 + $0x50] sm:$0xff]
  %v290 = vld [vmem:[%s6 + $0x58] sm:$0xff]
  %v291 = vld [vmem:[%s6 + $0x60] sm:$0xff]
  %v292 = vld [vmem:[%s6 + $0x68] sm:$0xff]
  %v293 = vld [vmem:[%s6 + $0x70] sm:$0xff]
  %v294 = vld [vmem:[%s6 + $0x78] sm:$0xff]
  %295 = vmatpush.msra.mxu0 %v294
  %296 = vmatpush.msra.mxu0 %v293
  %297 = vmatpush.msra.mxu0 %v292
  %298 = vmatpush.msra.mxu0 %v291
  %299 = vmatpush.msra.mxu0 %v290
  %300 = vmatpush.msra.mxu0 %v289
  %301 = vmatpush.msra.mxu0 %v288
  %302 = vmatpush.msra.mxu0 %v287
  %303 = vmatpush.msra.mxu0 %v286
  %304 = vmatpush.msra.mxu0 %v285
  %305 = vmatpush.msra.mxu0 %v284
  %306 = vmatpush.msra.mxu0 %v283
  %307 = vmatpush.msra.mxu0 %v282
  %308 = vmatpush.msra.mxu0 %v281
  %309 = vmatpush.msra.mxu0 %v280
  %310 = vmatpush.msra.mxu0 %v279
  %311 = vmatmul.f32.gmra.mxu0 %v236
  %v312 = vpop.f32.mrf.mxu0
  %v313 = vadd.f32 0.0, %v312
  %314 = vdwg.mxu0
  %v315 = vadd.f32 %v278, %v313
  %316 = vst.msk [vmem:[#allocation3] sm:$0x3] %vm276, %v315
  %v317 = vld [vmem:[#allocation4] sm:$0x3]
  %v318 = vld [vmem:[%s7] sm:$0xff]
  %v319 = vld [vmem:[%s7 + $0x8] sm:$0xff]
  %v320 = vld [vmem:[%s7 + $0x10] sm:$0xff]
  %v321 = vld [vmem:[%s7 + $0x18] sm:$0xff]
  %v322 = vld [vmem:[%s7 + $0x20] sm:$0xff]
  %v323 = vld [vmem:[%s7 + $0x28] sm:$0xff]
  %v324 = vld [vmem:[%s7 + $0x30] sm:$0xff]
  %v325 = vld [vmem:[%s7 + $0x38] sm:$0xff]
  %v326 = vld [vmem:[%s7 + $0x40] sm:$0xff]
  %v327 = vld [vmem:[%s7 + $0x48] sm:$0xff]
  %v328 = vld [vmem:[%s7 + $0x50] sm:$0xff]
  %v329 = vld [vmem:[%s7 + $0x58] sm:$0xff]
  %v330 = vld [vmem:[%s7 + $0x60] sm:$0xff]
  %v331 = vld [vmem:[%s7 + $0x68] sm:$0xff]
  %v332 = vld [vmem:[%s7 + $0x70] sm:$0xff]
  %v333 = vld [vmem:[%s7 + $0x78] sm:$0xff]
  %334 = vmatpush.msra.mxu0 %v333
  %335 = vmatpush.msra.mxu0 %v332
  %336 = vmatpush.msra.mxu0 %v331
  %337 = vmatpush.msra.mxu0 %v330
  %338 = vmatpush.msra.mxu0 %v329
  %339 = vmatpush.msra.mxu0 %v328
  %340 = vmatpush.msra.mxu0 %v327
  %341 = vmatpush.msra.mxu0 %v326
  %342 = vmatpush.msra.mxu0 %v325
  %343 = vmatpush.msra.mxu0 %v324
  %344 = vmatpush.msra.mxu0 %v323
  %345 = vmatpush.msra.mxu0 %v322
  %346 = vmatpush.msra.mxu0 %v321
  %347 = vmatpush.msra.mxu0 %v320
  %348 = vmatpush.msra.mxu0 %v319
  %349 = vmatpush.msra.mxu0 %v318
  %350 = vmatmul.f32.gmra.mxu0 %v236
  %v351 = vpop.f32.mrf.mxu0
  %v352 = vadd.f32 0.0, %v351
  %353 = vdwg.mxu0
  %v354 = vadd.f32 %v317, %v352
  %355 = vst.msk [vmem:[#allocation4] sm:$0x3] %vm276, %v354
  %v356 = vld [vmem:[#allocation5] sm:$0x3]
  %v357 = vld [vmem:[%s8] sm:$0xff]
  %v358 = vld [vmem:[%s8 + $0x8] sm:$0xff]
  %v359 = vld [vmem:[%s8 + $0x10] sm:$0xff]
  %v360 = vld [vmem:[%s8 + $0x18] sm:$0xff]
  %v361 = vld [vmem:[%s8 + $0x20] sm:$0xff]
  %v362 = vld [vmem:[%s8 + $0x28] sm:$0xff]
  %v363 = vld [vmem:[%s8 + $0x30] sm:$0xff]
  %v364 = vld [vmem:[%s8 + $0x38] sm:$0xff]
  %v365 = vld [vmem:[%s8 + $0x40] sm:$0xff]
  %v366 = vld [vmem:[%s8 + $0x48] sm:$0xff]
  %v367 = vld [vmem:[%s8 + $0x50] sm:$0xff]
  %v368 = vld [vmem:[%s8 + $0x58] sm:$0xff]
  %v369 = vld [vmem:[%s8 + $0x60] sm:$0xff]
  %v370 = vld [vmem:[%s8 + $0x68] sm:$0xff]
  %v371 = vld [vmem:[%s8 + $0x70] sm:$0xff]
  %v372 = vld [vmem:[%s8 + $0x78] sm:$0xff]
  %373 = vmatpush.msra.mxu0 %v372
  %374 = vmatpush.msra.mxu0 %v371
  %375 = vmatpush.msra.mxu0 %v370
  %376 = vmatpush.msra.mxu0 %v369
  %377 = vmatpush.msra.mxu0 %v368
  %378 = vmatpush.msra.mxu0 %v367
  %379 = vmatpush.msra.mxu0 %v366
  %380 = vmatpush.msra.mxu0 %v365
  %381 = vmatpush.msra.mxu0 %v364
  %382 = vmatpush.msra.mxu0 %v363
  %383 = vmatpush.msra.mxu0 %v362
  %384 = vmatpush.msra.mxu0 %v361
  %385 = vmatpush.msra.mxu0 %v360
  %386 = vmatpush.msra.mxu0 %v359
  %387 = vmatpush.msra.mxu0 %v358
  %388 = vmatpush.msra.mxu0 %v357
  %389 = vmatmul.f32.gmra.mxu0 %v236
  %v390 = vpop.f32.mrf.mxu0
  %v391 = vadd.f32 0.0, %v390
  %392 = vdwg.mxu0
  %v393 = vadd.f32 %v356, %v391
  %394 = vst.msk [vmem:[#allocation5] sm:$0x3] %vm276, %v393
  // Predicated region
  $region90: #{rma_forward.9} parent=0 // pred_check
    %p395 = pneg %p70
  $region91: #{rma_forward.9} parent=0 // pred_check_branch
    %397 = sbr.rel (%p395) target = $region93
  $region92: #{rma_forward.9} parent=0 // pred_region
    %v398 = vld [vmem:[%s1] sm:$0x3]
    %v399 = vld [vmem:[%s2] sm:$0x3]
    %v400 = vld [vmem:[#allocation2] sm:$0x3]
    %v401 = vld [vmem:[%s9] sm:$0xff]
    %v402 = vld [vmem:[%s9 + $0x8] sm:$0xff]
    %v403 = vld [vmem:[%s9 + $0x10] sm:$0xff]
    %v404 = vld [vmem:[%s9 + $0x18] sm:$0xff]
    %vm405 = vcmask 261120
    %v407 = vsel %vm405, %v398, 0
    %409 = vmatpush.msra.mxu0 0.0
    %410 = vmatpush.msra.mxu0 0.0
    %411 = vmatpush.msra.mxu0 0.0
    %412 = vmatpush.msra.mxu0 0.0
    %413 = vmatpush.msra.mxu0 0.0
    %414 = vmatpush.msra.mxu0 0.0
    %415 = vmatpush.msra.mxu0 0.0
    %416 = vmatpush.msra.mxu0 0.0
    %417 = vmatpush.msra.mxu0 0.0
    %418 = vmatpush.msra.mxu0 0.0
    %419 = vmatpush.msra.mxu0 0.0
    %420 = vmatpush.msra.mxu0 0.0
    %421 = vmatpush.msra.mxu0 %v404
    %422 = vmatpush.msra.mxu0 %v403
    %423 = vmatpush.msra.mxu0 %v402
    %424 = vmatpush.msra.mxu0 %v401
    %425 = vmatmul.f32.gmra.mxu0 %v407
    %v426 = vpop.f32.mrf.mxu0
    %v427 = vadd.f32 0.0, %v426
    %428 = vdwg.mxu0
    %v429 = vadd.f32 %v400, %v427
    %v430 = vld [vmem:[%s13] sm:$0x1]
    %v432 = vperm.slane %v430, 0
    %v434 = vadd.f32 %v429, %v432
    %v435 = vmul.f32 %v434, 0.5
    %v436 = vtanh.pop %v435
    %v437 = vadd.f32 %v436, 1.0
    %v438 = vmul.f32 %v437, 0.5
    %v439 = vld [vmem:[#allocation3] sm:$0x3]
    %v440 = vld [vmem:[%s10] sm:$0xff]
    %v441 = vld [vmem:[%s10 + $0x8] sm:$0xff]
    %v442 = vld [vmem:[%s10 + $0x10] sm:$0xff]
    %v443 = vld [vmem:[%s10 + $0x18] sm:$0xff]
    %444 = vmatpush.msra.mxu0 0.0
    %445 = vmatpush.msra.mxu0 0.0
    %446 = vmatpush.msra.mxu0 0.0
    %447 = vmatpush.msra.mxu0 0.0
    %448 = vmatpush.msra.mxu0 0.0
    %449 = vmatpush.msra.mxu0 0.0
    %450 = vmatpush.msra.mxu0 0.0
    %451 = vmatpush.msra.mxu0 0.0
    %452 = vmatpush.msra.mxu0 0.0
    %453 = vmatpush.msra.mxu0 0.0
    %454 = vmatpush.msra.mxu0 0.0
    %455 = vmatpush.msra.mxu0 0.0
    %456 = vmatpush.msra.mxu0 %v443
    %457 = vmatpush.msra.mxu0 %v442
    %458 = vmatpush.msra.mxu0 %v441
    %459 = vmatpush.msra.mxu0 %v440
    %460 = vmatmul.f32.gmra.mxu0 %v407
    %v461 = vpop.f32.mrf.mxu0
    %v462 = vadd.f32 0.0, %v461
    %463 = vdwg.mxu0
    %v464 = vadd.f32 %v439, %v462
    %v465 = vld [vmem:[%s14] sm:$0x1]
    %v467 = vperm.slane %v465, 0
    %v469 = vadd.f32 %v464, %v467
    %v470 = vmul.f32 %v469, 0.5
    %v471 = vtanh.pop %v470
    %v472 = vadd.f32 %v471, 1.0
    %v473 = vmul.f32 %v472, 0.5
    %v474 = vld [vmem:[#allocation4] sm:$0x3]
    %v475 = vld [vmem:[%s11] sm:$0xff]
    %v476 = vld [vmem:[%s11 + $0x8] sm:$0xff]
    %v477 = vld [vmem:[%s11 + $0x10] sm:$0xff]
    %v478 = vld [vmem:[%s11 + $0x18] sm:$0xff]
    %479 = vmatpush.msra.mxu0 0.0
    %480 = vmatpush.msra.mxu0 0.0
    %481 = vmatpush.msra.mxu0 0.0
    %482 = vmatpush.msra.mxu0 0.0
    %483 = vmatpush.msra.mxu0 0.0
    %484 = vmatpush.msra.mxu0 0.0
    %485 = vmatpush.msra.mxu0 0.0
    %486 = vmatpush.msra.mxu0 0.0
    %487 = vmatpush.msra.mxu0 0.0
    %488 = vmatpush.msra.mxu0 0.0
    %489 = vmatpush.msra.mxu0 0.0
    %490 = vmatpush.msra.mxu0 0.0
    %491 = vmatpush.msra.mxu0 %v478
    %492 = vmatpush.msra.mxu0 %v477
    %493 = vmatpush.msra.mxu0 %v476
    %494 = vmatpush.msra.mxu0 %v475
    %495 = vmatmul.f32.gmra.mxu0 %v407
    %v496 = vpop.f32.mrf.mxu0
    %v497 = vadd.f32 0.0, %v496
    %498 = vdwg.mxu0
    %v499 = vadd.f32 %v474, %v497
    %v500 = vld [vmem:[%s15] sm:$0x1]
    %v502 = vperm.slane %v500, 0
    %v504 = vadd.f32 %v499, %v502
    %v505 = vtanh.pop %v504
    %v506 = vld [vmem:[#allocation5] sm:$0x3]
    %v507 = vld [vmem:[%s12] sm:$0xff]
    %v508 = vld [vmem:[%s12 + $0x8] sm:$0xff]
    %v509 = vld [vmem:[%s12 + $0x10] sm:$0xff]
    %v510 = vld [vmem:[%s12 + $0x18] sm:$0xff]
    %511 = vmatpush.msra.mxu0 0.0
    %512 = vmatpush.msra.mxu0 0.0
    %513 = vmatpush.msra.mxu0 0.0
    %514 = vmatpush.msra.mxu0 0.0
    %515 = vmatpush.msra.mxu0 0.0
    %516 = vmatpush.msra.mxu0 0.0
    %517 = vmatpush.msra.mxu0 0.0
    %518 = vmatpush.msra.mxu0 0.0
    %519 = vmatpush.msra.mxu0 0.0
    %520 = vmatpush.msra.mxu0 0.0
    %521 = vmatpush.msra.mxu0 0.0
    %522 = vmatpush.msra.mxu0 0.0
    %523 = vmatpush.msra.mxu0 %v510
    %524 = vmatpush.msra.mxu0 %v509
    %525 = vmatpush.msra.mxu0 %v508
    %526 = vmatpush.msra.mxu0 %v507
    %527 = vmatmul.f32.gmra.mxu0 %v407
    %v528 = vpop.f32.mrf.mxu0
    %v529 = vadd.f32 0.0, %v528
    %530 = vdwg.mxu0
    %v531 = vadd.f32 %v506, %v529
    %v532 = vld [vmem:[%s16] sm:$0x1]
    %v534 = vperm.slane %v532, 0
    %v536 = vadd.f32 %v531, %v534
    %v537 = vmul.f32 %v536, 0.5
    %v538 = vtanh.pop %v537
    %v539 = vadd.f32 %v538, 1.0
    %v540 = vmul.f32 %v539, 0.5
    %v541 = vmul.f32 %v473, %v399
    %v542 = vmul.f32 %v438, %v505
    %v543 = vadd.f32 %v541, %v542
    %v544 = vtanh.pop %v543
    %v545 = vmul.f32 %v540, %v544
    %v546 = vld [vmem:[%s17] sm:$0xff]
    %v547 = vld [vmem:[%s17 + $0x8] sm:$0xff]
    %v548 = vld [vmem:[%s17 + $0x10] sm:$0xff]
    %v549 = vld [vmem:[%s17 + $0x18] sm:$0xff]
    %v550 = vld [vmem:[%s18] sm:$0x1]
    %v552 = vperm.slane %v550, 0
    %v555 = vsel %vm405, %v545, 0
    %557 = vmatpush.msra.mxu0 0.0
    %558 = vmatpush.msra.mxu0 0.0
    %559 = vmatpush.msra.mxu0 0.0
    %560 = vmatpush.msra.mxu0 0.0
    %561 = vmatpush.msra.mxu0 0.0
    %562 = vmatpush.msra.mxu0 0.0
    %563 = vmatpush.msra.mxu0 0.0
    %564 = vmatpush.msra.mxu0 0.0
    %565 = vmatpush.msra.mxu0 0.0
    %566 = vmatpush.msra.mxu0 0.0
    %567 = vmatpush.msra.mxu0 0.0
    %568 = vmatpush.msra.mxu0 0.0
    %569 = vmatpush.msra.mxu0 %v549
    %570 = vmatpush.msra.mxu0 %v548
    %571 = vmatpush.msra.mxu0 %v547
    %572 = vmatpush.msra.mxu0 %v546
    %573 = vmatmul.f32.gmra.mxu0 %v555
    %v574 = vpop.f32.mrf.mxu0
    %v575 = vadd.f32 %v552, %v574
    %576 = vdwg.mxu0
    %v577 = vmax.f32 %v575, 0.0
    %v578 = vld [vmem:[%s19] sm:$0xff]
    %v579 = vld [vmem:[%s19 + $0x8] sm:$0xff]
    %v580 = vld [vmem:[%s20] sm:$0x1]
    %v582 = vperm.slane %v580, 0
    %vm584 = vcmask 130048
    %v586 = vsel %vm584, %v577, 0
    %588 = vmatpush.msra.mxu0 0.0
    %589 = vmatpush.msra.mxu0 0.0
    %590 = vmatpush.msra.mxu0 0.0
    %591 = vmatpush.msra.mxu0 0.0
    %592 = vmatpush.msra.mxu0 0.0
    %593 = vmatpush.msra.mxu0 0.0
    %594 = vmatpush.msra.mxu0 0.0
    %595 = vmatpush.msra.mxu0 0.0
    %596 = vmatpush.msra.mxu0 0.0
    %597 = vmatpush.msra.mxu0 0.0
    %598 = vmatpush.msra.mxu0 0.0
    %599 = vmatpush.msra.mxu0 0.0
    %600 = vmatpush.msra.mxu0 0.0
    %601 = vmatpush.msra.mxu0 0.0
    %602 = vmatpush.msra.mxu0 %v579
    %603 = vmatpush.msra.mxu0 %v578
    %604 = vmatmul.f32.gmra.mxu0 %v586
    %v605 = vpop.f32.mrf.mxu0
    %v606 = vadd.f32 %v582, %v605
    %607 = vdwg.mxu0
    %vm608 = vcmask 123904
    %609 = vst.msk [vmem:[%s22] sm:$0x3] %vm608, %v606
    %610 = vst.msk [vmem:[%s21] sm:$0x3] %vm276, %v545
    %s611 = scalar_lea.vmem %s21, 2
    %612 = vst.msk [vmem:[%s611] sm:$0x3] %vm276, %v543
  $region93: #{rma_forward.9} parent=0 // pred_fallthru
    _
  // Predicated region
  $region94: #{rma_forward.9} parent=0 // pred_check
    _
  $region95: #{rma_forward.9} parent=0 // pred_check_branch
    %614 = sbr.rel (0) target = $region97
  $region96: #{rma_forward.9} parent=0 // pred_region
    _
  $region97: #{rma_forward.9} parent=0 // pred_fallthru
    _
  // Predicated region
  $region98: #{rma_forward.9} parent=0 // pred_check
    _
  $region99: #{rma_forward.9} parent=0 // pred_check_branch
    %616 = sbr.rel (0) target = $region101
  $region100: #{rma_forward.9} parent=0 // pred_region
    _
  $region101: #{rma_forward.9} parent=0 // pred_fallthru
    _
  // Predicated region
  $region102: #{rma_forward.9} parent=0 // pred_check
    _
  $region103: #{rma_forward.9} parent=0 // pred_check_branch
    %618 = sbr.rel (0) target = $region105
  $region104: #{rma_forward.9} parent=0 // pred_region
    _
  $region105: #{rma_forward.9} parent=0 // pred_fallthru
    _
  // Predicated region
  $region106: #{rma_forward.9} parent=0 // pred_check
    _
  $region107: #{rma_forward.9} parent=0 // pred_check_branch
    %620 = sbr.rel (0) target = $region109
  $region108: #{rma_forward.9} parent=0 // pred_region
    _
  $region109: #{rma_forward.9} parent=0 // pred_fallthru
    _

// kernel: rma_forward.15
$region0: #{rma_forward.15}
  #allocation0 [shape = 'u32[]', space=smem, size = 0x4, offset = 0x4, fixed_abs, tag = 'smem constant byte address 0x4 - core index']
  #allocation1 [shape = 'u32[72,128]{1,0:T(1,128)}', space=vmem, size = 0x9000, scoped, tag = 'internal scratch']
  #allocation2 [shape = 'f32[2,32]{1,0:T(2,128)}', space=vmem, size = 0x400, scoped, tag = 'scratch operand']
  #allocation3 [shape = 'f32[2,32]{1,0:T(2,128)}', space=vmem, size = 0x400, scoped, tag = 'scratch operand']
  #allocation4 [shape = 'f32[2,32]{1,0:T(2,128)}', space=vmem, size = 0x400, scoped, tag = 'scratch operand']
  #allocation5 [shape = 'f32[2,32]{1,0:T(2,128)}', space=vmem, size = 0x400, scoped, tag = 'scratch operand']
  %s0 = inlined_call_operand.vmem [shape: f32[2,512], index: 0, kind: input, shape index: {}]
  %s1 = inlined_call_operand.vmem [shape: f32[2,32], index: 1, kind: input, shape index: {}]
  %s2 = inlined_call_operand.vmem [shape: f32[2,32], index: 2, kind: input, shape index: {}]
  %s3 = inlined_call_operand.vmem [shape: f32[512,128], index: 3, kind: input, shape index: {}]
  %s4 = inlined_call_operand.vmem [shape: f32[1,128], index: 4, kind: input, shape index: {}]
  %s5 = inlined_call_operand.vmem [shape: f32[128,32], index: 5, kind: input, shape index: {}]
  %s6 = inlined_call_operand.vmem [shape: f32[128,32], index: 6, kind: input, shape index: {}]
  %s7 = inlined_call_operand.vmem [shape: f32[128,32], index: 7, kind: input, shape index: {}]
  %s8 = inlined_call_operand.vmem [shape: f32[128,32], index: 8, kind: input, shape index: {}]
  %s9 = inlined_call_operand.vmem [shape: f32[32,32], index: 9, kind: input, shape index: {}]
  %s10 = inlined_call_operand.vmem [shape: f32[32,32], index: 10, kind: input, shape index: {}]
  %s11 = inlined_call_operand.vmem [shape: f32[32,32], index: 11, kind: input, shape index: {}]
  %s12 = inlined_call_operand.vmem [shape: f32[32,32], index: 12, kind: input, shape index: {}]
  %s13 = inlined_call_operand.vmem [shape: f32[1,32], index: 13, kind: input, shape index: {}]
  %s14 = inlined_call_operand.vmem [shape: f32[1,32], index: 14, kind: input, shape index: {}]
  %s15 = inlined_call_operand.vmem [shape: f32[1,32], index: 15, kind: input, shape index: {}]
  %s16 = inlined_call_operand.vmem [shape: f32[1,32], index: 16, kind: input, shape index: {}]
  %s17 = inlined_call_operand.vmem [shape: f32[32,16], index: 17, kind: input, shape index: {}]
  %s18 = inlined_call_operand.vmem [shape: f32[1,16], index: 18, kind: input, shape index: {}]
  %s19 = inlined_call_operand.vmem [shape: f32[16,16], index: 19, kind: input, shape index: {}]
  %s20 = inlined_call_operand.vmem [shape: f32[1,16], index: 20, kind: input, shape index: {}]
  %s21 = inlined_call_operand.hbm [shape: f32[2,2,32], index: 21, kind: output, shape index: {0}]
  %s22 = inlined_call_operand.vmem [shape: f32[2,16], index: 22, kind: output, shape index: {1}]
  %23 = xla_tuple %s21, %s22
  %s24 = sld [smem:[#allocation0]]
  $region110: #{rma_forward.15} parent=0
    _
  %s26 = ssub.s32 1, %s24
  %s27 = scalar_select 0, %s26, %s24
  $region1: #{rma_forward.15} parent=0
    #allocation6 [shape = 'u8[2048]{0}', space=vmem, size = 0x800, scoped, tag = 'output window, operand 0, single buffered']
    #allocation7 [shape = 's32[1]{0}', space=sflag, size = 0x4, scoped, tag = 'scoped memory for rma_forward.15']
    %28 = vsyncpa [#allocation7], 0
    // Predicated region
    $region2: #{rma_forward.15} parent=1 // pred_check
      _
    $region3: #{rma_forward.15} parent=1 // pred_check_branch
      %30 = sbr.rel (0) target = $region5
    $region4: #{rma_forward.15} parent=1 // pred_region
      _
    $region5: #{rma_forward.15} parent=1 // pred_fallthru
      _
    // Predicated region
    $region6: #{rma_forward.15} parent=1 // pred_check
      _
    $region7: #{rma_forward.15} parent=1 // pred_check_branch
      %32 = sbr.rel (0) target = $region9
    $region8: #{rma_forward.15} parent=1 // pred_region
      _
    $region9: #{rma_forward.15} parent=1 // pred_fallthru
      _
    // Predicated region
    $region10: #{rma_forward.15} parent=1 // pred_check
      _
    $region11: #{rma_forward.15} parent=1 // pred_check_branch
      %34 = sbr.rel (0) target = $region13
    $region12: #{rma_forward.15} parent=1 // pred_region
      _
    $region13: #{rma_forward.15} parent=1 // pred_fallthru
      _
    // Predicated region
    $region14: #{rma_forward.15} parent=1 // pred_check
      _
    $region15: #{rma_forward.15} parent=1 // pred_check_branch
      %36 = sbr.rel (0) target = $region17
    $region16: #{rma_forward.15} parent=1 // pred_region
      _
    $region17: #{rma_forward.15} parent=1 // pred_fallthru
      _
    // Predicated region
    $region18: #{rma_forward.15} parent=1 // pred_check
      _
    $region19: #{rma_forward.15} parent=1 // pred_check_branch
      %38 = sbr.rel (0) target = $region21
    $region20: #{rma_forward.15} parent=1 // pred_region
      _
    $region21: #{rma_forward.15} parent=1 // pred_fallthru
      _
    // Predicated region
    $region22: #{rma_forward.15} parent=1 // pred_check
      _
    $region23: #{rma_forward.15} parent=1 // pred_check_branch
      %40 = sbr.rel (0) target = $region25
    $region24: #{rma_forward.15} parent=1 // pred_region
      _
    $region25: #{rma_forward.15} parent=1 // pred_fallthru
      _
    // Predicated region
    $region26: #{rma_forward.15} parent=1 // pred_check
      _
    $region27: #{rma_forward.15} parent=1 // pred_check_branch
      %42 = sbr.rel (0) target = $region29
    $region28: #{rma_forward.15} parent=1 // pred_region
      _
    $region29: #{rma_forward.15} parent=1 // pred_fallthru
      _
    // Predicated region
    $region30: #{rma_forward.15} parent=1 // pred_check
      _
    $region31: #{rma_forward.15} parent=1 // pred_check_branch
      %44 = sbr.rel (0) target = $region33
    $region32: #{rma_forward.15} parent=1 // pred_region
      _
    $region33: #{rma_forward.15} parent=1 // pred_fallthru
      _
    // Predicated region
    $region34: #{rma_forward.15} parent=1 // pred_check
      _
    $region35: #{rma_forward.15} parent=1 // pred_check_branch
      %46 = sbr.rel (0) target = $region37
    $region36: #{rma_forward.15} parent=1 // pred_region
      _
    $region37: #{rma_forward.15} parent=1 // pred_fallthru
      _
    // Predicated region
    $region38: #{rma_forward.15} parent=1 // pred_check
      _
    $region39: #{rma_forward.15} parent=1 // pred_check_branch
      %48 = sbr.rel (0) target = $region41
    $region40: #{rma_forward.15} parent=1 // pred_region
      _
    $region41: #{rma_forward.15} parent=1 // pred_fallthru
      _
    // Predicated region
    $region42: #{rma_forward.15} parent=1 // pred_check
      _
    $region43: #{rma_forward.15} parent=1 // pred_check_branch
      %50 = sbr.rel (0) target = $region45
    $region44: #{rma_forward.15} parent=1 // pred_region
      _
    $region45: #{rma_forward.15} parent=1 // pred_fallthru
      _
    // Predicated region
    $region46: #{rma_forward.15} parent=1 // pred_check
      _
    $region47: #{rma_forward.15} parent=1 // pred_check_branch
      %52 = sbr.rel (0) target = $region49
    $region48: #{rma_forward.15} parent=1 // pred_region
      _
    $region49: #{rma_forward.15} parent=1 // pred_fallthru
      _
    // Predicated region
    $region50: #{rma_forward.15} parent=1 // pred_check
      _
    $region51: #{rma_forward.15} parent=1 // pred_check_branch
      %54 = sbr.rel (0) target = $region53
    $region52: #{rma_forward.15} parent=1 // pred_region
      _
    $region53: #{rma_forward.15} parent=1 // pred_fallthru
      _
    // Predicated region
    $region54: #{rma_forward.15} parent=1 // pred_check
      _
    $region55: #{rma_forward.15} parent=1 // pred_check_branch
      %56 = sbr.rel (0) target = $region57
    $region56: #{rma_forward.15} parent=1 // pred_region
      _
    $region57: #{rma_forward.15} parent=1 // pred_fallthru
      _
    // Predicated region
    $region58: #{rma_forward.15} parent=1 // pred_check
      _
    $region59: #{rma_forward.15} parent=1 // pred_check_branch
      %58 = sbr.rel (0) target = $region61
    $region60: #{rma_forward.15} parent=1 // pred_region
      _
    $region61: #{rma_forward.15} parent=1 // pred_fallthru
      _
    // Predicated region
    $region62: #{rma_forward.15} parent=1 // pred_check
      _
    $region63: #{rma_forward.15} parent=1 // pred_check_branch
      %60 = sbr.rel (0) target = $region65
    $region64: #{rma_forward.15} parent=1 // pred_region
      _
    $region65: #{rma_forward.15} parent=1 // pred_fallthru
      _
    // Predicated region
    $region66: #{rma_forward.15} parent=1 // pred_check
      _
    $region67: #{rma_forward.15} parent=1 // pred_check_branch
      %62 = sbr.rel (0) target = $region69
    $region68: #{rma_forward.15} parent=1 // pred_region
      _
    $region69: #{rma_forward.15} parent=1 // pred_fallthru
      _
    // Predicated region
    $region70: #{rma_forward.15} parent=1 // pred_check
      _
    $region71: #{rma_forward.15} parent=1 // pred_check_branch
      %64 = sbr.rel (0) target = $region73
    $region72: #{rma_forward.15} parent=1 // pred_region
      _
    $region73: #{rma_forward.15} parent=1 // pred_fallthru
      _
    // Predicated region
    $region74: #{rma_forward.15} parent=1 // pred_check
      _
    $region75: #{rma_forward.15} parent=1 // pred_check_branch
      %66 = sbr.rel (0) target = $region77
    $region76: #{rma_forward.15} parent=1 // pred_region
      _
    $region77: #{rma_forward.15} parent=1 // pred_fallthru
      _
    // Predicated region
    $region78: #{rma_forward.15} parent=1 // pred_check
      _
    $region79: #{rma_forward.15} parent=1 // pred_check_branch
      %68 = sbr.rel (0) target = $region81
    $region80: #{rma_forward.15} parent=1 // pred_region
      _
    $region81: #{rma_forward.15} parent=1 // pred_fallthru
      _
    // Predicated region
    $region82: #{rma_forward.15} parent=1 // pred_check
      _
    $region83: #{rma_forward.15} parent=1 // pred_check_branch
      %70 = sbr.rel (0) target = $region85
    $region84: #{rma_forward.15} parent=1 // pred_region
      _
    $region85: #{rma_forward.15} parent=1 // pred_fallthru
      _
    %p71 = scmp.eq.s32.totalorder 0, 0
    // Predicated region
    $region86: #{rma_forward.15} parent=1 // pred_check
      %p72 = pneg %p71
    $region87: #{rma_forward.15} parent=1 // pred_check_branch
      %74 = sbr.rel (%p72) target = $region89
    $region88: #{rma_forward.15} parent=1 // pred_region
      %vm75 = vcmask 254976
      %76 = vst.msk [vmem:[#allocation2] sm:$0x3] %vm75, 0.0
      %77 = vst.msk [vmem:[#allocation3] sm:$0x3] %vm75, 0.0
      %78 = vst.msk [vmem:[#allocation4] sm:$0x3] %vm75, 0.0
      %79 = vst.msk [vmem:[#allocation5] sm:$0x3] %vm75, 0.0
    $region89: #{rma_forward.15} parent=1 // pred_fallthru
      _
    %v80 = vld [vmem:[%s0] sm:$0xff]
    %v81 = vld [vmem:[%s3] sm:$0xff]
    %v82 = vld [vmem:[%s3 + $0x8] sm:$0xff]
    %v83 = vld [vmem:[%s3 + $0x10] sm:$0xff]
    %v84 = vld [vmem:[%s3 + $0x18] sm:$0xff]
    %v85 = vld [vmem:[%s3 + $0x20] sm:$0xff]
    %v86 = vld [vmem:[%s3 + $0x28] sm:$0xff]
    %v87 = vld [vmem:[%s3 + $0x30] sm:$0xff]
    %v88 = vld [vmem:[%s3 + $0x38] sm:$0xff]
    %v89 = vld [vmem:[%s3 + $0x40] sm:$0xff]
    %v90 = vld [vmem:[%s3 + $0x48] sm:$0xff]
    %v91 = vld [vmem:[%s3 + $0x50] sm:$0xff]
    %v92 = vld [vmem:[%s3 + $0x58] sm:$0xff]
    %v93 = vld [vmem:[%s3 + $0x60] sm:$0xff]
    %v94 = vld [vmem:[%s3 + $0x68] sm:$0xff]
    %v95 = vld [vmem:[%s3 + $0x70] sm:$0xff]
    %v96 = vld [vmem:[%s3 + $0x78] sm:$0xff]
    %v97 = vld [vmem:[%s3 + $0x80] sm:$0xff]
    %v98 = vld [vmem:[%s3 + $0x88] sm:$0xff]
    %v99 = vld [vmem:[%s3 + $0x90] sm:$0xff]
    %v100 = vld [vmem:[%s3 + $0x98] sm:$0xff]
    %v101 = vld [vmem:[%s3 + $0xa0] sm:$0xff]
    %v102 = vld [vmem:[%s3 + $0xa8] sm:$0xff]
    %v103 = vld [vmem:[%s3 + $0xb0] sm:$0xff]
    %v104 = vld [vmem:[%s3 + $0xb8] sm:$0xff]
    %v105 = vld [vmem:[%s3 + $0xc0] sm:$0xff]
    %v106 = vld [vmem:[%s3 + $0xc8] sm:$0xff]
    %v107 = vld [vmem:[%s3 + $0xd0] sm:$0xff]
    %v108 = vld [vmem:[%s3 + $0xd8] sm:$0xff]
    %v109 = vld [vmem:[%s3 + $0xe0] sm:$0xff]
    %v110 = vld [vmem:[%s3 + $0xe8] sm:$0xff]
    %v111 = vld [vmem:[%s3 + $0xf0] sm:$0xff]
    %v112 = vld [vmem:[%s3 + $0xf8] sm:$0xff]
    %v113 = vld [vmem:[%s3 + $0x100] sm:$0xff]
    %v114 = vld [vmem:[%s3 + $0x108] sm:$0xff]
    %v115 = vld [vmem:[%s3 + $0x110] sm:$0xff]
    %v116 = vld [vmem:[%s3 + $0x118] sm:$0xff]
    %v117 = vld [vmem:[%s3 + $0x120] sm:$0xff]
    %v118 = vld [vmem:[%s3 + $0x128] sm:$0xff]
    %v119 = vld [vmem:[%s3 + $0x130] sm:$0xff]
    %v120 = vld [vmem:[%s3 + $0x138] sm:$0xff]
    %v121 = vld [vmem:[%s3 + $0x140] sm:$0xff]
    %v122 = vld [vmem:[%s3 + $0x148] sm:$0xff]
    %v123 = vld [vmem:[%s3 + $0x150] sm:$0xff]
    %v124 = vld [vmem:[%s3 + $0x158] sm:$0xff]
    %v125 = vld [vmem:[%s3 + $0x160] sm:$0xff]
    %v126 = vld [vmem:[%s3 + $0x168] sm:$0xff]
    %v127 = vld [vmem:[%s3 + $0x170] sm:$0xff]
    %v128 = vld [vmem:[%s3 + $0x178] sm:$0xff]
    %v129 = vld [vmem:[%s3 + $0x180] sm:$0xff]
    %v130 = vld [vmem:[%s3 + $0x188] sm:$0xff]
    %v131 = vld [vmem:[%s3 + $0x190] sm:$0xff]
    %v132 = vld [vmem:[%s3 + $0x198] sm:$0xff]
    %v133 = vld [vmem:[%s3 + $0x1a0] sm:$0xff]
    %v134 = vld [vmem:[%s3 + $0x1a8] sm:$0xff]
    %v135 = vld [vmem:[%s3 + $0x1b0] sm:$0xff]
    %v136 = vld [vmem:[%s3 + $0x1b8] sm:$0xff]
    %v137 = vld [vmem:[%s3 + $0x1c0] sm:$0xff]
    %v138 = vld [vmem:[%s3 + $0x1c8] sm:$0xff]
    %v139 = vld [vmem:[%s3 + $0x1d0] sm:$0xff]
    %v140 = vld [vmem:[%s3 + $0x1d8] sm:$0xff]
    %v141 = vld [vmem:[%s3 + $0x1e0] sm:$0xff]
    %v142 = vld [vmem:[%s3 + $0x1e8] sm:$0xff]
    %v143 = vld [vmem:[%s3 + $0x1f0] sm:$0xff]
    %v144 = vld [vmem:[%s3 + $0x1f8] sm:$0xff]
    %v145 = vld [vmem:[%s4] sm:$0x1]
    %v147 = vperm.slane %v145, 0
    %150 = vst [vmem:[#allocation1] ss:$4 sm:$0xff] %v80
    %v151 = vld.sshfl [vmem:[#allocation1] sm:$0xff pattern:$0x73625140]
    %v152 = vld.sshfl [vmem:[#allocation1 + $0x8] sm:$0xff pattern:$0x73625140]
    %v153 = vld.sshfl [vmem:[#allocation1 + $0x10] sm:$0xff pattern:$0x73625140]
    %v154 = vld.sshfl [vmem:[#allocation1 + $0x18] sm:$0xff pattern:$0x73625140]
    %159 = vmatpush.msra.mxu0 %v96
    %160 = vmatpush.msra.mxu0 %v95
    %161 = vmatpush.msra.mxu0 %v94
    %162 = vmatpush.msra.mxu0 %v93
    %163 = vmatpush.msra.mxu0 %v92
    %164 = vmatpush.msra.mxu0 %v91
    %165 = vmatpush.msra.mxu0 %v90
    %166 = vmatpush.msra.mxu0 %v89
    %167 = vmatpush.msra.mxu0 %v88
    %168 = vmatpush.msra.mxu0 %v87
    %169 = vmatpush.msra.mxu0 %v86
    %170 = vmatpush.msra.mxu0 %v85
    %171 = vmatpush.msra.mxu0 %v84
    %172 = vmatpush.msra.mxu0 %v83
    %173 = vmatpush.msra.mxu0 %v82
    %174 = vmatpush.msra.mxu0 %v81
    %175 = vmatmul.f32.gmra.mxu0 %v151
    %v176 = vpop.f32.mrf.mxu0
    %v177 = vadd.f32 %v147, %v176
    %178 = vdwg.mxu0
    %179 = vmatpush.msra.mxu0 %v112
    %180 = vmatpush.msra.mxu0 %v111
    %181 = vmatpush.msra.mxu0 %v110
    %182 = vmatpush.msra.mxu0 %v109
    %183 = vmatpush.msra.mxu0 %v108
    %184 = vmatpush.msra.mxu0 %v107
    %185 = vmatpush.msra.mxu0 %v106
    %186 = vmatpush.msra.mxu0 %v105
    %187 = vmatpush.msra.mxu0 %v104
    %188 = vmatpush.msra.mxu0 %v103
    %189 = vmatpush.msra.mxu0 %v102
    %190 = vmatpush.msra.mxu0 %v101
    %191 = vmatpush.msra.mxu0 %v100
    %192 = vmatpush.msra.mxu0 %v99
    %193 = vmatpush.msra.mxu0 %v98
    %194 = vmatpush.msra.mxu0 %v97
    %195 = vmatmul.f32.gmra.mxu0 %v152
    %v196 = vpop.f32.mrf.mxu0
    %v197 = vadd.f32 %v177, %v196
    %198 = vdwg.mxu0
    %199 = vmatpush.msra.mxu0 %v128
    %200 = vmatpush.msra.mxu0 %v127
    %201 = vmatpush.msra.mxu0 %v126
    %202 = vmatpush.msra.mxu0 %v125
    %203 = vmatpush.msra.mxu0 %v124
    %204 = vmatpush.msra.mxu0 %v123
    %205 = vmatpush.msra.mxu0 %v122
    %206 = vmatpush.msra.mxu0 %v121
    %207 = vmatpush.msra.mxu0 %v120
    %208 = vmatpush.msra.mxu0 %v119
    %209 = vmatpush.msra.mxu0 %v118
    %210 = vmatpush.msra.mxu0 %v117
    %211 = vmatpush.msra.mxu0 %v116
    %212 = vmatpush.msra.mxu0 %v115
    %213 = vmatpush.msra.mxu0 %v114
    %214 = vmatpush.msra.mxu0 %v113
    %215 = vmatmul.f32.gmra.mxu0 %v153
    %v216 = vpop.f32.mrf.mxu0
    %v217 = vadd.f32 %v197, %v216
    %218 = vdwg.mxu0
    %219 = vmatpush.msra.mxu0 %v144
    %220 = vmatpush.msra.mxu0 %v143
    %221 = vmatpush.msra.mxu0 %v142
    %222 = vmatpush.msra.mxu0 %v141
    %223 = vmatpush.msra.mxu0 %v140
    %224 = vmatpush.msra.mxu0 %v139
    %225 = vmatpush.msra.mxu0 %v138
    %226 = vmatpush.msra.mxu0 %v137
    %227 = vmatpush.msra.mxu0 %v136
    %228 = vmatpush.msra.mxu0 %v135
    %229 = vmatpush.msra.mxu0 %v134
    %230 = vmatpush.msra.mxu0 %v133
    %231 = vmatpush.msra.mxu0 %v132
    %232 = vmatpush.msra.mxu0 %v131
    %233 = vmatpush.msra.mxu0 %v130
    %234 = vmatpush.msra.mxu0 %v129
    %235 = vmatmul.f32.gmra.mxu0 %v154
    %v236 = vpop.f32.mrf.mxu0
    %v237 = vadd.f32 %v217, %v236
    %238 = vdwg.mxu0
    %v239 = vld [vmem:[#allocation2] sm:$0x3]
    %v240 = vld [vmem:[%s5] sm:$0xff]
    %v241 = vld [vmem:[%s5 + $0x8] sm:$0xff]
    %v242 = vld [vmem:[%s5 + $0x10] sm:$0xff]
    %v243 = vld [vmem:[%s5 + $0x18] sm:$0xff]
    %v244 = vld [vmem:[%s5 + $0x20] sm:$0xff]
    %v245 = vld [vmem:[%s5 + $0x28] sm:$0xff]
    %v246 = vld [vmem:[%s5 + $0x30] sm:$0xff]
    %v247 = vld [vmem:[%s5 + $0x38] sm:$0xff]
    %v248 = vld [vmem:[%s5 + $0x40] sm:$0xff]
    %v249 = vld [vmem:[%s5 + $0x48] sm:$0xff]
    %v250 = vld [vmem:[%s5 + $0x50] sm:$0xff]
    %v251 = vld [vmem:[%s5 + $0x58] sm:$0xff]
    %v252 = vld [vmem:[%s5 + $0x60] sm:$0xff]
    %v253 = vld [vmem:[%s5 + $0x68] sm:$0xff]
    %v254 = vld [vmem:[%s5 + $0x70] sm:$0xff]
    %v255 = vld [vmem:[%s5 + $0x78] sm:$0xff]
    %256 = vmatpush.msra.mxu0 %v255
    %257 = vmatpush.msra.mxu0 %v254
    %258 = vmatpush.msra.mxu0 %v253
    %259 = vmatpush.msra.mxu0 %v252
    %260 = vmatpush.msra.mxu0 %v251
    %261 = vmatpush.msra.mxu0 %v250
    %262 = vmatpush.msra.mxu0 %v249
    %263 = vmatpush.msra.mxu0 %v248
    %264 = vmatpush.msra.mxu0 %v247
    %265 = vmatpush.msra.mxu0 %v246
    %266 = vmatpush.msra.mxu0 %v245
    %267 = vmatpush.msra.mxu0 %v244
    %268 = vmatpush.msra.mxu0 %v243
    %269 = vmatpush.msra.mxu0 %v242
    %270 = vmatpush.msra.mxu0 %v241
    %271 = vmatpush.msra.mxu0 %v240
    %272 = vmatmul.f32.gmra.mxu0 %v237
    %v273 = vpop.f32.mrf.mxu0
    %v274 = vadd.f32 0.0, %v273
    %275 = vdwg.mxu0
    %v276 = vadd.f32 %v239, %v274
    %vm277 = vcmask 254976
    %278 = vst.msk [vmem:[#allocation2] sm:$0x3] %vm277, %v276
    %v279 = vld [vmem:[#allocation3] sm:$0x3]
    %v280 = vld [vmem:[%s6] sm:$0xff]
    %v281 = vld [vmem:[%s6 + $0x8] sm:$0xff]
    %v282 = vld [vmem:[%s6 + $0x10] sm:$0xff]
    %v283 = vld [vmem:[%s6 + $0x18] sm:$0xff]
    %v284 = vld [vmem:[%s6 + $0x20] sm:$0xff]
    %v285 = vld [vmem:[%s6 + $0x28] sm:$0xff]
    %v286 = vld [vmem:[%s6 + $0x30] sm:$0xff]
    %v287 = vld [vmem:[%s6 + $0x38] sm:$0xff]
    %v288 = vld [vmem:[%s6 + $0x40] sm:$0xff]
    %v289 = vld [vmem:[%s6 + $0x48] sm:$0xff]
    %v290 = vld [vmem:[%s6 + $0x50] sm:$0xff]
    %v291 = vld [vmem:[%s6 + $0x58] sm:$0xff]
    %v292 = vld [vmem:[%s6 + $0x60] sm:$0xff]
    %v293 = vld [vmem:[%s6 + $0x68] sm:$0xff]
    %v294 = vld [vmem:[%s6 + $0x70] sm:$0xff]
    %v295 = vld [vmem:[%s6 + $0x78] sm:$0xff]
    %296 = vmatpush.msra.mxu0 %v295
    %297 = vmatpush.msra.mxu0 %v294
    %298 = vmatpush.msra.mxu0 %v293
    %299 = vmatpush.msra.mxu0 %v292
    %300 = vmatpush.msra.mxu0 %v291
    %301 = vmatpush.msra.mxu0 %v290
    %302 = vmatpush.msra.mxu0 %v289
    %303 = vmatpush.msra.mxu0 %v288
    %304 = vmatpush.msra.mxu0 %v287
    %305 = vmatpush.msra.mxu0 %v286
    %306 = vmatpush.msra.mxu0 %v285
    %307 = vmatpush.msra.mxu0 %v284
    %308 = vmatpush.msra.mxu0 %v283
    %309 = vmatpush.msra.mxu0 %v282
    %310 = vmatpush.msra.mxu0 %v281
    %311 = vmatpush.msra.mxu0 %v280
    %312 = vmatmul.f32.gmra.mxu0 %v237
    %v313 = vpop.f32.mrf.mxu0
    %v314 = vadd.f32 0.0, %v313
    %315 = vdwg.mxu0
    %v316 = vadd.f32 %v279, %v314
    %317 = vst.msk [vmem:[#allocation3] sm:$0x3] %vm277, %v316
    %v318 = vld [vmem:[#allocation4] sm:$0x3]
    %v319 = vld [vmem:[%s7] sm:$0xff]
    %v320 = vld [vmem:[%s7 + $0x8] sm:$0xff]
    %v321 = vld [vmem:[%s7 + $0x10] sm:$0xff]
    %v322 = vld [vmem:[%s7 + $0x18] sm:$0xff]
    %v323 = vld [vmem:[%s7 + $0x20] sm:$0xff]
    %v324 = vld [vmem:[%s7 + $0x28] sm:$0xff]
    %v325 = vld [vmem:[%s7 + $0x30] sm:$0xff]
    %v326 = vld [vmem:[%s7 + $0x38] sm:$0xff]
    %v327 = vld [vmem:[%s7 + $0x40] sm:$0xff]
    %v328 = vld [vmem:[%s7 + $0x48] sm:$0xff]
    %v329 = vld [vmem:[%s7 + $0x50] sm:$0xff]
    %v330 = vld [vmem:[%s7 + $0x58] sm:$0xff]
    %v331 = vld [vmem:[%s7 + $0x60] sm:$0xff]
    %v332 = vld [vmem:[%s7 + $0x68] sm:$0xff]
    %v333 = vld [vmem:[%s7 + $0x70] sm:$0xff]
    %v334 = vld [vmem:[%s7 + $0x78] sm:$0xff]
    %335 = vmatpush.msra.mxu0 %v334
    %336 = vmatpush.msra.mxu0 %v333
    %337 = vmatpush.msra.mxu0 %v332
    %338 = vmatpush.msra.mxu0 %v331
    %339 = vmatpush.msra.mxu0 %v330
    %340 = vmatpush.msra.mxu0 %v329
    %341 = vmatpush.msra.mxu0 %v328
    %342 = vmatpush.msra.mxu0 %v327
    %343 = vmatpush.msra.mxu0 %v326
    %344 = vmatpush.msra.mxu0 %v325
    %345 = vmatpush.msra.mxu0 %v324
    %346 = vmatpush.msra.mxu0 %v323
    %347 = vmatpush.msra.mxu0 %v322
    %348 = vmatpush.msra.mxu0 %v321
    %349 = vmatpush.msra.mxu0 %v320
    %350 = vmatpush.msra.mxu0 %v319
    %351 = vmatmul.f32.gmra.mxu0 %v237
    %v352 = vpop.f32.mrf.mxu0
    %v353 = vadd.f32 0.0, %v352
    %354 = vdwg.mxu0
    %v355 = vadd.f32 %v318, %v353
    %356 = vst.msk [vmem:[#allocation4] sm:$0x3] %vm277, %v355
    %v357 = vld [vmem:[#allocation5] sm:$0x3]
    %v358 = vld [vmem:[%s8] sm:$0xff]
    %v359 = vld [vmem:[%s8 + $0x8] sm:$0xff]
    %v360 = vld [vmem:[%s8 + $0x10] sm:$0xff]
    %v361 = vld [vmem:[%s8 + $0x18] sm:$0xff]
    %v362 = vld [vmem:[%s8 + $0x20] sm:$0xff]
    %v363 = vld [vmem:[%s8 + $0x28] sm:$0xff]
    %v364 = vld [vmem:[%s8 + $0x30] sm:$0xff]
    %v365 = vld [vmem:[%s8 + $0x38] sm:$0xff]
    %v366 = vld [vmem:[%s8 + $0x40] sm:$0xff]
    %v367 = vld [vmem:[%s8 + $0x48] sm:$0xff]
    %v368 = vld [vmem:[%s8 + $0x50] sm:$0xff]
    %v369 = vld [vmem:[%s8 + $0x58] sm:$0xff]
    %v370 = vld [vmem:[%s8 + $0x60] sm:$0xff]
    %v371 = vld [vmem:[%s8 + $0x68] sm:$0xff]
    %v372 = vld [vmem:[%s8 + $0x70] sm:$0xff]
    %v373 = vld [vmem:[%s8 + $0x78] sm:$0xff]
    %374 = vmatpush.msra.mxu0 %v373
    %375 = vmatpush.msra.mxu0 %v372
    %376 = vmatpush.msra.mxu0 %v371
    %377 = vmatpush.msra.mxu0 %v370
    %378 = vmatpush.msra.mxu0 %v369
    %379 = vmatpush.msra.mxu0 %v368
    %380 = vmatpush.msra.mxu0 %v367
    %381 = vmatpush.msra.mxu0 %v366
    %382 = vmatpush.msra.mxu0 %v365
    %383 = vmatpush.msra.mxu0 %v364
    %384 = vmatpush.msra.mxu0 %v363
    %385 = vmatpush.msra.mxu0 %v362
    %386 = vmatpush.msra.mxu0 %v361
    %387 = vmatpush.msra.mxu0 %v360
    %388 = vmatpush.msra.mxu0 %v359
    %389 = vmatpush.msra.mxu0 %v358
    %390 = vmatmul.f32.gmra.mxu0 %v237
    %v391 = vpop.f32.mrf.mxu0
    %v392 = vadd.f32 0.0, %v391
    %393 = vdwg.mxu0
    %v394 = vadd.f32 %v357, %v392
    %395 = vst.msk [vmem:[#allocation5] sm:$0x3] %vm277, %v394
    // Predicated region
    $region90: #{rma_forward.15} parent=1 // pred_check
      %p396 = pneg %p71
    $region91: #{rma_forward.15} parent=1 // pred_check_branch
      %398 = sbr.rel (%p396) target = $region93
    $region92: #{rma_forward.15} parent=1 // pred_region
      %v399 = vld [vmem:[%s1] sm:$0x3]
      %v400 = vld [vmem:[%s2] sm:$0x3]
      %v401 = vld [vmem:[#allocation2] sm:$0x3]
      %v402 = vld [vmem:[%s9] sm:$0xff]
      %v403 = vld [vmem:[%s9 + $0x8] sm:$0xff]
      %v404 = vld [vmem:[%s9 + $0x10] sm:$0xff]
      %v405 = vld [vmem:[%s9 + $0x18] sm:$0xff]
      %vm406 = vcmask 261120
      %v408 = vsel %vm406, %v399, 0
      %410 = vmatpush.msra.mxu0 0.0
      %411 = vmatpush.msra.mxu0 0.0
      %412 = vmatpush.msra.mxu0 0.0
      %413 = vmatpush.msra.mxu0 0.0
      %414 = vmatpush.msra.mxu0 0.0
      %415 = vmatpush.msra.mxu0 0.0
      %416 = vmatpush.msra.mxu0 0.0
      %417 = vmatpush.msra.mxu0 0.0
      %418 = vmatpush.msra.mxu0 0.0
      %419 = vmatpush.msra.mxu0 0.0
      %420 = vmatpush.msra.mxu0 0.0
      %421 = vmatpush.msra.mxu0 0.0
      %422 = vmatpush.msra.mxu0 %v405
      %423 = vmatpush.msra.mxu0 %v404
      %424 = vmatpush.msra.mxu0 %v403
      %425 = vmatpush.msra.mxu0 %v402
      %426 = vmatmul.f32.gmra.mxu0 %v408
      %v427 = vpop.f32.mrf.mxu0
      %v428 = vadd.f32 0.0, %v427
      %429 = vdwg.mxu0
      %v430 = vadd.f32 %v401, %v428
      %v431 = vld [vmem:[%s13] sm:$0x1]
      %v433 = vperm.slane %v431, 0
      %v435 = vadd.f32 %v430, %v433
      %v436 = vmul.f32 %v435, 0.5
      %v437 = vtanh.pop %v436
      %v438 = vadd.f32 %v437, 1.0
      %v439 = vmul.f32 %v438, 0.5
      %v440 = vld [vmem:[#allocation3] sm:$0x3]
      %v441 = vld [vmem:[%s10] sm:$0xff]
      %v442 = vld [vmem:[%s10 + $0x8] sm:$0xff]
      %v443 = vld [vmem:[%s10 + $0x10] sm:$0xff]
      %v444 = vld [vmem:[%s10 + $0x18] sm:$0xff]
      %445 = vmatpush.msra.mxu0 0.0
      %446 = vmatpush.msra.mxu0 0.0
      %447 = vmatpush.msra.mxu0 0.0
      %448 = vmatpush.msra.mxu0 0.0
      %449 = vmatpush.msra.mxu0 0.0
      %450 = vmatpush.msra.mxu0 0.0
      %451 = vmatpush.msra.mxu0 0.0
      %452 = vmatpush.msra.mxu0 0.0
      %453 = vmatpush.msra.mxu0 0.0
      %454 = vmatpush.msra.mxu0 0.0
      %455 = vmatpush.msra.mxu0 0.0
      %456 = vmatpush.msra.mxu0 0.0
      %457 = vmatpush.msra.mxu0 %v444
      %458 = vmatpush.msra.mxu0 %v443
      %459 = vmatpush.msra.mxu0 %v442
      %460 = vmatpush.msra.mxu0 %v441
      %461 = vmatmul.f32.gmra.mxu0 %v408
      %v462 = vpop.f32.mrf.mxu0
      %v463 = vadd.f32 0.0, %v462
      %464 = vdwg.mxu0
      %v465 = vadd.f32 %v440, %v463
      %v466 = vld [vmem:[%s14] sm:$0x1]
      %v468 = vperm.slane %v466, 0
      %v470 = vadd.f32 %v465, %v468
      %v471 = vmul.f32 %v470, 0.5
      %v472 = vtanh.pop %v471
      %v473 = vadd.f32 %v472, 1.0
      %v474 = vmul.f32 %v473, 0.5
      %v475 = vld [vmem:[#allocation4] sm:$0x3]
      %v476 = vld [vmem:[%s11] sm:$0xff]
      %v477 = vld [vmem:[%s11 + $0x8] sm:$0xff]
      %v478 = vld [vmem:[%s11 + $0x10] sm:$0xff]
      %v479 = vld [vmem:[%s11 + $0x18] sm:$0xff]
      %480 = vmatpush.msra.mxu0 0.0
      %481 = vmatpush.msra.mxu0 0.0
      %482 = vmatpush.msra.mxu0 0.0
      %483 = vmatpush.msra.mxu0 0.0
      %484 = vmatpush.msra.mxu0 0.0
      %485 = vmatpush.msra.mxu0 0.0
      %486 = vmatpush.msra.mxu0 0.0
      %487 = vmatpush.msra.mxu0 0.0
      %488 = vmatpush.msra.mxu0 0.0
      %489 = vmatpush.msra.mxu0 0.0
      %490 = vmatpush.msra.mxu0 0.0
      %491 = vmatpush.msra.mxu0 0.0
      %492 = vmatpush.msra.mxu0 %v479
      %493 = vmatpush.msra.mxu0 %v478
      %494 = vmatpush.msra.mxu0 %v477
      %495 = vmatpush.msra.mxu0 %v476
      %496 = vmatmul.f32.gmra.mxu0 %v408
      %v497 = vpop.f32.mrf.mxu0
      %v498 = vadd.f32 0.0, %v497
      %499 = vdwg.mxu0
      %v500 = vadd.f32 %v475, %v498
      %v501 = vld [vmem:[%s15] sm:$0x1]
      %v503 = vperm.slane %v501, 0
      %v505 = vadd.f32 %v500, %v503
      %v506 = vtanh.pop %v505
      %v507 = vld [vmem:[#allocation5] sm:$0x3]
      %v508 = vld [vmem:[%s12] sm:$0xff]
      %v509 = vld [vmem:[%s12 + $0x8] sm:$0xff]
      %v510 = vld [vmem:[%s12 + $0x10] sm:$0xff]
      %v511 = vld [vmem:[%s12 + $0x18] sm:$0xff]
      %512 = vmatpush.msra.mxu0 0.0
      %513 = vmatpush.msra.mxu0 0.0
      %514 = vmatpush.msra.mxu0 0.0
      %515 = vmatpush.msra.mxu0 0.0
      %516 = vmatpush.msra.mxu0 0.0
      %517 = vmatpush.msra.mxu0 0.0
      %518 = vmatpush.msra.mxu0 0.0
      %519 = vmatpush.msra.mxu0 0.0
      %520 = vmatpush.msra.mxu0 0.0
      %521 = vmatpush.msra.mxu0 0.0
      %522 = vmatpush.msra.mxu0 0.0
      %523 = vmatpush.msra.mxu0 0.0
      %524 = vmatpush.msra.mxu0 %v511
      %525 = vmatpush.msra.mxu0 %v510
      %526 = vmatpush.msra.mxu0 %v509
      %527 = vmatpush.msra.mxu0 %v508
      %528 = vmatmul.f32.gmra.mxu0 %v408
      %v529 = vpop.f32.mrf.mxu0
      %v530 = vadd.f32 0.0, %v529
      %531 = vdwg.mxu0
      %v532 = vadd.f32 %v507, %v530
      %v533 = vld [vmem:[%s16] sm:$0x1]
      %v535 = vperm.slane %v533, 0
      %v537 = vadd.f32 %v532, %v535
      %v538 = vmul.f32 %v537, 0.5
      %v539 = vtanh.pop %v538
      %v540 = vadd.f32 %v539, 1.0
      %v541 = vmul.f32 %v540, 0.5
      %v542 = vmul.f32 %v474, %v400
      %v543 = vmul.f32 %v439, %v506
      %v544 = vadd.f32 %v542, %v543
      %v545 = vtanh.pop %v544
      %v546 = vmul.f32 %v541, %v545
      %v547 = vld [vmem:[%s17] sm:$0xff]
      %v548 = vld [vmem:[%s17 + $0x8] sm:$0xff]
      %v549 = vld [vmem:[%s17 + $0x10] sm:$0xff]
      %v550 = vld [vmem:[%s17 + $0x18] sm:$0xff]
      %v551 = vld [vmem:[%s18] sm:$0x1]
      %v553 = vperm.slane %v551, 0
      %v556 = vsel %vm406, %v546, 0
      %558 = vmatpush.msra.mxu0 0.0
      %559 = vmatpush.msra.mxu0 0.0
      %560 = vmatpush.msra.mxu0 0.0
      %561 = vmatpush.msra.mxu0 0.0
      %562 = vmatpush.msra.mxu0 0.0
      %563 = vmatpush.msra.mxu0 0.0
      %564 = vmatpush.msra.mxu0 0.0
      %565 = vmatpush.msra.mxu0 0.0
      %566 = vmatpush.msra.mxu0 0.0
      %567 = vmatpush.msra.mxu0 0.0
      %568 = vmatpush.msra.mxu0 0.0
      %569 = vmatpush.msra.mxu0 0.0
      %570 = vmatpush.msra.mxu0 %v550
      %571 = vmatpush.msra.mxu0 %v549
      %572 = vmatpush.msra.mxu0 %v548
      %573 = vmatpush.msra.mxu0 %v547
      %574 = vmatmul.f32.gmra.mxu0 %v556
      %v575 = vpop.f32.mrf.mxu0
      %v576 = vadd.f32 %v553, %v575
      %577 = vdwg.mxu0
      %v578 = vmax.f32 %v576, 0.0
      %v579 = vld [vmem:[%s19] sm:$0xff]
      %v580 = vld [vmem:[%s19 + $0x8] sm:$0xff]
      %v581 = vld [vmem:[%s20] sm:$0x1]
      %v583 = vperm.slane %v581, 0
      %vm585 = vcmask 130048
      %v587 = vsel %vm585, %v578, 0
      %589 = vmatpush.msra.mxu0 0.0
      %590 = vmatpush.msra.mxu0 0.0
      %591 = vmatpush.msra.mxu0 0.0
      %592 = vmatpush.msra.mxu0 0.0
      %593 = vmatpush.msra.mxu0 0.0
      %594 = vmatpush.msra.mxu0 0.0
      %595 = vmatpush.msra.mxu0 0.0
      %596 = vmatpush.msra.mxu0 0.0
      %597 = vmatpush.msra.mxu0 0.0
      %598 = vmatpush.msra.mxu0 0.0
      %599 = vmatpush.msra.mxu0 0.0
      %600 = vmatpush.msra.mxu0 0.0
      %601 = vmatpush.msra.mxu0 0.0
      %602 = vmatpush.msra.mxu0 0.0
      %603 = vmatpush.msra.mxu0 %v580
      %604 = vmatpush.msra.mxu0 %v579
      %605 = vmatmul.f32.gmra.mxu0 %v587
      %v606 = vpop.f32.mrf.mxu0
      %v607 = vadd.f32 %v583, %v606
      %608 = vdwg.mxu0
      %vm609 = vcmask 123904
      %610 = vst.msk [vmem:[%s22] sm:$0x3] %vm609, %v607
      %611 = vst.msk [vmem:[#allocation6] sm:$0x3] %vm277, %v546
      %s612 = scalar_lea.vmem [#allocation6], 2
      %613 = vst.msk [vmem:[%s612] sm:$0x3] %vm277, %v544
    $region93: #{rma_forward.15} parent=1 // pred_fallthru
      _
    // Predicated region
    $region94: #{rma_forward.15} parent=1 // pred_check
      _
    $region95: #{rma_forward.15} parent=1 // pred_check_branch
      %615 = sbr.rel (0) target = $region97
    $region96: #{rma_forward.15} parent=1 // pred_region
      %617 = vsyncadd [#allocation7], 0
      %s618 = sshll.u32 [#allocation6], 4
      %s619 = int_to_ptr.vmem [resolvable:$true] %s618
      %s620 = sshll.u32 %s21, 4
      %s621 = int_to_ptr.hbm [resolvable:$true] %s620
      %626 = dma.vmem_to_hbm [thread:$0]  %s619, 64, %s621, [#allocation7], 32, 32, 2
    $region97: #{rma_forward.15} parent=1 // pred_fallthru
      _
    // Predicated region
    $region98: #{rma_forward.15} parent=1 // pred_check
      _
    $region99: #{rma_forward.15} parent=1 // pred_check_branch
      %628 = sbr.rel (0) target = $region101
    $region100: #{rma_forward.15} parent=1 // pred_region
      _
    $region101: #{rma_forward.15} parent=1 // pred_fallthru
      _
    // Predicated region
    $region102: #{rma_forward.15} parent=1 // pred_check
      _
    $region103: #{rma_forward.15} parent=1 // pred_check_branch
      %630 = sbr.rel (0) target = $region105
    $region104: #{rma_forward.15} parent=1 // pred_region
      %632 = dma.done [#allocation7], 64
    $region105: #{rma_forward.15} parent=1 // pred_fallthru
      _
    // Predicated region
    $region106: #{rma_forward.15} parent=1 // pred_check
      _
    $region107: #{rma_forward.15} parent=1 // pred_check_branch
      %634 = sbr.rel (0) target = $region109
    $region108: #{rma_forward.15} parent=1 // pred_region
      _
    $region109: #{rma_forward.15} parent=1 // pred_fallthru
      _
    %635 = vsyncpa [#allocation7], 1

</llo_original>
